<compile_context>
chip_gen: v6e
topology: v6e:2x2x1
jax: 0.10.0
libtpu: 0.0.40
codegen_flags: <defaults>
</compile_context>

<pallas_src>
import functools

import jax
import jax.numpy as jnp
from jax.experimental import pallas as pl
from jax.experimental.pallas import tpu as pltpu


# ----------------------------- Pallas kernel --------------------------------


def gcn_fused_kernel(*refs, K, n_layers, neg_slope=0.2):
    """All graphs x all layers of the GCN in one kernel invocation.

    refs layout:
      refs[0]                : h0_ref   (B*N, in_dim)       shared input features
      refs[1]                : atb_ref  (K, B*N, B*N)       kron(I_B, A_k^T)
      refs[2 + 4*i .. +3]    : W_i, b_i, Wres_i, bres_i     stacked over graphs K
      refs[2 + 4*n_layers]   : o_ref    (B*N, out_dim)      sum over the K graphs
    """
    h0_ref = refs[0]
    atb_ref = refs[1]
    w_refs = refs[2:2 + 4 * n_layers]
    o_ref = refs[2 + 4 * n_layers]

    h0 = h0_ref[...]          # (B*N, in_dim), loaded once and reused per graph
    acc = None

    for k in range(K):
        at_blk = atb_ref[k]   # (B*N, B*N) block-diagonal per-batch A^T
        h = h0
        for i in range(n_layers):
            w = w_refs[4 * i][k]          # (Din, Dout)
            b = w_refs[4 * i + 1][k]      # (1, Dout)
            wr = w_refs[4 * i + 2][k]     # (Din, Dout)
            br = w_refs[4 * i + 3][k]     # (1, Dout)
            din, dout = w.shape

            # residual branch (big-M matmul over B*N rows)
            h_res = jnp.dot(h, wr, preferred_element_type=jnp.float32) + br

            # main branch: A^T H W + b — single blocked aggregation matmul,
            # associativity chosen so aggregation runs on the narrower width.
            if din <= dout:
                h_agg = jnp.dot(at_blk, h, preferred_element_type=jnp.float32)
                h_main = jnp.dot(h_agg, w,
                                 preferred_element_type=jnp.float32) + b
            else:
                h_w = jnp.dot(h, w, preferred_element_type=jnp.float32)
                h_main = jnp.dot(at_blk, h_w,
                                 preferred_element_type=jnp.float32) + b

            z = h_main + h_res
            h = jnp.where(z >= 0, z, neg_slope * z)   # LeakyReLU(0.2)

        acc = h if acc is None else acc + h           # in-kernel graph sum

    o_ref[...] = acc


def gcn_forward(X, A_list, stacked_params, n_layers, ylength):
    """Full GCN forward matching the torch module, one fused pallas_call."""
    B, T, Nn, Fdim = X.shape
    in_dim = T * Fdim
    out_dim = stacked_params[-1][0].shape[-1]
    K = len(A_list)

    # X.permute(0,2,1,3).view(B, N, -1), then fold B into the row axis.
    H0 = jnp.transpose(X, (0, 2, 1, 3)).reshape(B * Nn, in_dim)

    # Block-diagonal per-batch adjacency transpose, built once in the wrapper:
    # aggregation of all batch elements is a single dense MXU matmul.
    eye_b = jnp.eye(B, dtype=jnp.float32)
    AT_blocked = jnp.stack([jnp.kron(eye_b, A.T) for A in A_list])  # (K,BN,BN)

    flat_w = []
    for (W, b, Wres, bres) in stacked_params:
        flat_w += [W, b, Wres, bres]

    kernel = functools.partial(gcn_fused_kernel, K=K, n_layers=n_layers)

    out = pl.pallas_call(
        kernel,
        out_shape=jax.ShapeDtypeStruct((B * Nn, out_dim), jnp.float32),
        compiler_params=pltpu.CompilerParams(
            vmem_limit_bytes=32 * 1024 * 1024,
        ),
    )(H0, AT_blocked, *flat_w)

    # reshape like the torch module: view(B, N, ylength, -1).permute(0,2,1,3)
    return out.reshape(B, Nn, ylength, out_dim // ylength).transpose(0, 2, 1, 3)


# ----------------------------- model glue ------------------------------------


def normalize_sym(A):
    """symmetric normalize: D^{-1/2} A D^{-1/2}, d = rowsum(A)."""
    d = A.sum(axis=1)
    d_inv_sqrt = jnp.power(d, -0.5)
    D = jnp.diag(d_inv_sqrt)
    return D @ A @ D


def init_linear(key, fan_in, fan_out):
    """Deterministic init mimicking nn.Linear (uniform +-1/sqrt(fan_in)).
    Weight returned as (fan_in, fan_out) for H @ W."""
    kw, kb = jax.random.split(key)
    bound = 1.0 / jnp.sqrt(jnp.float32(fan_in))
    W = jax.random.uniform(kw, (fan_in, fan_out), jnp.float32, -bound, bound)
    b = jax.random.uniform(kb, (fan_out,), jnp.float32, -bound, bound)
    return W, b


def make_params(key, in_dim, hid_dim, out_dim, n_layers, n_graphs=3):
    """Per-layer params stacked over the graph axis:
    list of (W (K,Din,Dout), b (K,1,Dout), Wres (K,Din,Dout), bres (K,1,Dout))."""
    per_graph = []
    for _k in range(n_graphs):
        layers = []
        for i in range(n_layers):
            if i == 0:
                din, dout = in_dim, hid_dim
            elif i == n_layers - 1:
                din, dout = hid_dim, out_dim
            else:
                din, dout = hid_dim, hid_dim
            key, k1, k2 = jax.random.split(key, 3)
            W, b = init_linear(k1, din, dout)
            Wres, bres = init_linear(k2, din, dout)
            layers.append((W, b, Wres, bres))
        per_graph.append(layers)

    stacked = []
    for i in range(n_layers):
        W = jnp.stack([per_graph[k][i][0] for k in range(n_graphs)])
        b = jnp.stack([per_graph[k][i][1] for k in range(n_graphs)])[:, None, :]
        Wres = jnp.stack([per_graph[k][i][2] for k in range(n_graphs)])
        bres = jnp.stack([per_graph[k][i][3] for k in range(n_graphs)])[:, None, :]
        stacked.append((W, b, Wres, bres))
    return stacked


def gcn_forward_ref(X, A_list, stacked_params, n_layers, ylength):
    """Pure-JAX reference (no Pallas) for correctness check."""
    B, T, Nn, Fdim = X.shape
    H0 = jnp.transpose(X, (0, 2, 1, 3)).reshape(B, Nn, T * Fdim)
    outs = []
    for k in range(len(A_list)):
        H = H0
        A = A_list[k]
        for i in range(n_layers):
            W, b, Wres, bres = (p[k] for p in stacked_params[i])
            H_prime = H @ Wres + bres
            H = jnp.einsum("mn,bmd->bnd", A, H)   # (H^T A)^T == A^T @ H
            H = H @ W + b
            z = H + H_prime
            H = jnp.where(z >= 0, z, 0.2 * z)
        Dout = H.shape[-1]
        outs.append(
            H.reshape(B, Nn, ylength, Dout // ylength).transpose(0, 2, 1, 3)
        )
    res = outs[0]
    for o in outs[1:]:
        res = res + o
    return res


# ----------------------------- main ------------------------------------------

if __name__ == "__main__":
    # Small shapes consistent with the module:
    #   X: (B, T, N, F) -> in_dim = T * F ; out_dim must be divisible by ylength
    B, T, N, F = 2, 4, 8, 4
    in_dim = T * F          # 16
    hid_dim = 32
    ylength = 4
    out_dim = 8             # -> final output (B, ylength, N, out_dim // ylength)
    n_layers = 3

    key = jax.random.PRNGKey(0)
    kx, ke, kr, kp, kparam = jax.random.split(key, 5)

    X = jax.random.normal(kx, (B, T, N, F), jnp.float32)

    # Raw "distance"-style matrices; the module uses (A > 0).float() then
    # symmetric normalization.  Add identity so every row sum is > 0.
    def make_adj(k):
        raw = jax.random.uniform(k, (N, N), jnp.float32)
        binary = (raw > 0.5).astype(jnp.float32)
        binary = jnp.maximum(binary, jnp.eye(N, dtype=jnp.float32))
        return normalize_sym(binary)

    A_list = [make_adj(ke), make_adj(kr), make_adj(kp)]  # euc, road, poi order

    params = make_params(kparam, in_dim, hid_dim, out_dim, n_layers)

    out = gcn_forward(X, A_list, params, n_layers, ylength)
    out = jax.block_until_ready(out)

    ref = gcn_forward_ref(X, A_list, params, n_layers, ylength)
    ref = jax.block_until_ready(ref)

    assert out.shape == (B, ylength, N, out_dim // ylength), out.shape
    assert jnp.allclose(out, ref, rtol=1e-4, atol=1e-4), (
        float(jnp.max(jnp.abs(out - ref)))
    )

    print("KERNEL_OK")
</pallas_src>

<mosaic_0001>
module attributes {stable_mosaic.version = 11 : i64} {
  func.func @gcn_fused_kernel(%arg0: memref<16x16xf32, #tpu.memory_space<vmem>>, %arg1: memref<3x16x16xf32, #tpu.memory_space<vmem>>, %arg2: memref<3x16x32xf32, #tpu.memory_space<vmem>>, %arg3: memref<3x1x32xf32, #tpu.memory_space<vmem>>, %arg4: memref<3x16x32xf32, #tpu.memory_space<vmem>>, %arg5: memref<3x1x32xf32, #tpu.memory_space<vmem>>, %arg6: memref<3x32x32xf32, #tpu.memory_space<vmem>>, %arg7: memref<3x1x32xf32, #tpu.memory_space<vmem>>, %arg8: memref<3x32x32xf32, #tpu.memory_space<vmem>>, %arg9: memref<3x1x32xf32, #tpu.memory_space<vmem>>, %arg10: memref<3x32x8xf32, #tpu.memory_space<vmem>>, %arg11: memref<3x1x8xf32, #tpu.memory_space<vmem>>, %arg12: memref<3x32x8xf32, #tpu.memory_space<vmem>>, %arg13: memref<3x1x8xf32, #tpu.memory_space<vmem>>, %arg14: memref<16x8xf32, #tpu.memory_space<vmem>>) attributes {dimension_semantics = [], scalar_prefetch = 0 : i64, scratch_operands = 0 : i64, tpu.core_type = #tpu.core_type<tc>} {
    %c0 = arith.constant 0 : index
    %c0_0 = arith.constant 0 : index
    %0 = vector.load %arg0[%c0, %c0_0] : memref<16x16xf32, #tpu.memory_space<vmem>>, vector<16x16xf32>
    %c0_1 = arith.constant 0 : index
    %c0_2 = arith.constant 0 : index
    %c0_3 = arith.constant 0 : index
    %1 = vector.load %arg1[%c0_1, %c0_2, %c0_3] : memref<3x16x16xf32, #tpu.memory_space<vmem>>, vector<1x16x16xf32>
    %2 = vector.shape_cast %1 : vector<1x16x16xf32> to vector<16x16xf32>
    %c0_4 = arith.constant 0 : index
    %c0_5 = arith.constant 0 : index
    %c0_6 = arith.constant 0 : index
    %3 = vector.load %arg2[%c0_4, %c0_5, %c0_6] : memref<3x16x32xf32, #tpu.memory_space<vmem>>, vector<1x16x32xf32>
    %4 = vector.shape_cast %3 : vector<1x16x32xf32> to vector<16x32xf32>
    %c0_7 = arith.constant 0 : index
    %c0_8 = arith.constant 0 : index
    %c0_9 = arith.constant 0 : index
    %5 = vector.load %arg3[%c0_7, %c0_8, %c0_9] : memref<3x1x32xf32, #tpu.memory_space<vmem>>, vector<1x1x32xf32>
    %6 = vector.shape_cast %5 : vector<1x1x32xf32> to vector<1x32xf32>
    %c0_10 = arith.constant 0 : index
    %c0_11 = arith.constant 0 : index
    %c0_12 = arith.constant 0 : index
    %7 = vector.load %arg4[%c0_10, %c0_11, %c0_12] : memref<3x16x32xf32, #tpu.memory_space<vmem>>, vector<1x16x32xf32>
    %8 = vector.shape_cast %7 : vector<1x16x32xf32> to vector<16x32xf32>
    %c0_13 = arith.constant 0 : index
    %c0_14 = arith.constant 0 : index
    %c0_15 = arith.constant 0 : index
    %9 = vector.load %arg5[%c0_13, %c0_14, %c0_15] : memref<3x1x32xf32, #tpu.memory_space<vmem>>, vector<1x1x32xf32>
    %10 = vector.shape_cast %9 : vector<1x1x32xf32> to vector<1x32xf32>
    %cst = arith.constant dense<0.000000e+00> : vector<16x32xf32>
    %11 = tpu.matmul %0, %8, %cst {dimension_numbers = #tpu.dot_dimension_numbers<[1], [0], [0], [1], [0, 0, 1, 1], [], []>} : vector<16x16xf32>, vector<16x32xf32>, vector<16x32xf32> -> vector<16x32xf32>
    %12 = vector.broadcast %10 : vector<1x32xf32> to vector<16x32xf32>
    %13 = arith.addf %11, %12 : vector<16x32xf32>
    %cst_16 = arith.constant dense<0.000000e+00> : vector<16x16xf32>
    %14 = tpu.matmul %2, %0, %cst_16 {dimension_numbers = #tpu.dot_dimension_numbers<[1], [0], [0], [1], [0, 0, 1, 1], [], []>} : vector<16x16xf32>, vector<16x16xf32>, vector<16x16xf32> -> vector<16x16xf32>
    %cst_17 = arith.constant dense<0.000000e+00> : vector<16x32xf32>
    %15 = tpu.matmul %14, %4, %cst_17 {dimension_numbers = #tpu.dot_dimension_numbers<[1], [0], [0], [1], [0, 0, 1, 1], [], []>} : vector<16x16xf32>, vector<16x32xf32>, vector<16x32xf32> -> vector<16x32xf32>
    %16 = vector.broadcast %6 : vector<1x32xf32> to vector<16x32xf32>
    %17 = arith.addf %15, %16 : vector<16x32xf32>
    %18 = arith.addf %17, %13 : vector<16x32xf32>
    %cst_18 = arith.constant 0.000000e+00 : f32
    %19 = vector.broadcast %cst_18 : f32 to vector<16x32xf32>
    %20 = arith.cmpf oge, %18, %19 : vector<16x32xf32>
    %cst_19 = arith.constant 2.000000e-01 : f32
    %21 = vector.broadcast %cst_19 : f32 to vector<16x32xf32>
    %22 = arith.mulf %21, %18 : vector<16x32xf32>
    %23 = arith.select %20, %18, %22 : vector<16x32xi1>, vector<16x32xf32>
    %c0_20 = arith.constant 0 : index
    %c0_21 = arith.constant 0 : index
    %c0_22 = arith.constant 0 : index
    %24 = vector.load %arg6[%c0_20, %c0_21, %c0_22] : memref<3x32x32xf32, #tpu.memory_space<vmem>>, vector<1x32x32xf32>
    %25 = vector.shape_cast %24 : vector<1x32x32xf32> to vector<32x32xf32>
    %c0_23 = arith.constant 0 : index
    %c0_24 = arith.constant 0 : index
    %c0_25 = arith.constant 0 : index
    %26 = vector.load %arg7[%c0_23, %c0_24, %c0_25] : memref<3x1x32xf32, #tpu.memory_space<vmem>>, vector<1x1x32xf32>
    %27 = vector.shape_cast %26 : vector<1x1x32xf32> to vector<1x32xf32>
    %c0_26 = arith.constant 0 : index
    %c0_27 = arith.constant 0 : index
    %c0_28 = arith.constant 0 : index
    %28 = vector.load %arg8[%c0_26, %c0_27, %c0_28] : memref<3x32x32xf32, #tpu.memory_space<vmem>>, vector<1x32x32xf32>
    %29 = vector.shape_cast %28 : vector<1x32x32xf32> to vector<32x32xf32>
    %c0_29 = arith.constant 0 : index
    %c0_30 = arith.constant 0 : index
    %c0_31 = arith.constant 0 : index
    %30 = vector.load %arg9[%c0_29, %c0_30, %c0_31] : memref<3x1x32xf32, #tpu.memory_space<vmem>>, vector<1x1x32xf32>
    %31 = vector.shape_cast %30 : vector<1x1x32xf32> to vector<1x32xf32>
    %cst_32 = arith.constant dense<0.000000e+00> : vector<16x32xf32>
    %32 = tpu.matmul %23, %29, %cst_32 {dimension_numbers = #tpu.dot_dimension_numbers<[1], [0], [0], [1], [0, 0, 1, 1], [], []>} : vector<16x32xf32>, vector<32x32xf32>, vector<16x32xf32> -> vector<16x32xf32>
    %33 = vector.broadcast %31 : vector<1x32xf32> to vector<16x32xf32>
    %34 = arith.addf %32, %33 : vector<16x32xf32>
    %cst_33 = arith.constant dense<0.000000e+00> : vector<16x32xf32>
    %35 = tpu.matmul %2, %23, %cst_33 {dimension_numbers = #tpu.dot_dimension_numbers<[1], [0], [0], [1], [0, 0, 1, 1], [], []>} : vector<16x16xf32>, vector<16x32xf32>, vector<16x32xf32> -> vector<16x32xf32>
    %cst_34 = arith.constant dense<0.000000e+00> : vector<16x32xf32>
    %36 = tpu.matmul %35, %25, %cst_34 {dimension_numbers = #tpu.dot_dimension_numbers<[1], [0], [0], [1], [0, 0, 1, 1], [], []>} : vector<16x32xf32>, vector<32x32xf32>, vector<16x32xf32> -> vector<16x32xf32>
    %37 = vector.broadcast %27 : vector<1x32xf32> to vector<16x32xf32>
    %38 = arith.addf %36, %37 : vector<16x32xf32>
    %39 = arith.addf %38, %34 : vector<16x32xf32>
    %cst_35 = arith.constant 0.000000e+00 : f32
    %40 = vector.broadcast %cst_35 : f32 to vector<16x32xf32>
    %41 = arith.cmpf oge, %39, %40 : vector<16x32xf32>
    %cst_36 = arith.constant 2.000000e-01 : f32
    %42 = vector.broadcast %cst_36 : f32 to vector<16x32xf32>
    %43 = arith.mulf %42, %39 : vector<16x32xf32>
    %44 = arith.select %41, %39, %43 : vector<16x32xi1>, vector<16x32xf32>
    %c0_37 = arith.constant 0 : index
    %c0_38 = arith.constant 0 : index
    %c0_39 = arith.constant 0 : index
    %45 = vector.load %arg10[%c0_37, %c0_38, %c0_39] : memref<3x32x8xf32, #tpu.memory_space<vmem>>, vector<1x32x8xf32>
    %46 = vector.shape_cast %45 : vector<1x32x8xf32> to vector<32x8xf32>
    %c0_40 = arith.constant 0 : index
    %c0_41 = arith.constant 0 : index
    %c0_42 = arith.constant 0 : index
    %47 = vector.load %arg11[%c0_40, %c0_41, %c0_42] : memref<3x1x8xf32, #tpu.memory_space<vmem>>, vector<1x1x8xf32>
    %48 = vector.shape_cast %47 : vector<1x1x8xf32> to vector<1x8xf32>
    %c0_43 = arith.constant 0 : index
    %c0_44 = arith.constant 0 : index
    %c0_45 = arith.constant 0 : index
    %49 = vector.load %arg12[%c0_43, %c0_44, %c0_45] : memref<3x32x8xf32, #tpu.memory_space<vmem>>, vector<1x32x8xf32>
    %50 = vector.shape_cast %49 : vector<1x32x8xf32> to vector<32x8xf32>
    %c0_46 = arith.constant 0 : index
    %c0_47 = arith.constant 0 : index
    %c0_48 = arith.constant 0 : index
    %51 = vector.load %arg13[%c0_46, %c0_47, %c0_48] : memref<3x1x8xf32, #tpu.memory_space<vmem>>, vector<1x1x8xf32>
    %52 = vector.shape_cast %51 : vector<1x1x8xf32> to vector<1x8xf32>
    %cst_49 = arith.constant dense<0.000000e+00> : vector<16x8xf32>
    %53 = tpu.matmul %44, %50, %cst_49 {dimension_numbers = #tpu.dot_dimension_numbers<[1], [0], [0], [1], [0, 0, 1, 1], [], []>} : vector<16x32xf32>, vector<32x8xf32>, vector<16x8xf32> -> vector<16x8xf32>
    %54 = vector.broadcast %52 : vector<1x8xf32> to vector<16x8xf32>
    %55 = arith.addf %53, %54 : vector<16x8xf32>
    %cst_50 = arith.constant dense<0.000000e+00> : vector<16x8xf32>
    %56 = tpu.matmul %44, %46, %cst_50 {dimension_numbers = #tpu.dot_dimension_numbers<[1], [0], [0], [1], [0, 0, 1, 1], [], []>} : vector<16x32xf32>, vector<32x8xf32>, vector<16x8xf32> -> vector<16x8xf32>
    %cst_51 = arith.constant dense<0.000000e+00> : vector<16x8xf32>
    %57 = tpu.matmul %2, %56, %cst_51 {dimension_numbers = #tpu.dot_dimension_numbers<[1], [0], [0], [1], [0, 0, 1, 1], [], []>} : vector<16x16xf32>, vector<16x8xf32>, vector<16x8xf32> -> vector<16x8xf32>
    %58 = vector.broadcast %48 : vector<1x8xf32> to vector<16x8xf32>
    %59 = arith.addf %57, %58 : vector<16x8xf32>
    %60 = arith.addf %59, %55 : vector<16x8xf32>
    %cst_52 = arith.constant 0.000000e+00 : f32
    %61 = vector.broadcast %cst_52 : f32 to vector<16x8xf32>
    %62 = arith.cmpf oge, %60, %61 : vector<16x8xf32>
    %cst_53 = arith.constant 2.000000e-01 : f32
    %63 = vector.broadcast %cst_53 : f32 to vector<16x8xf32>
    %64 = arith.mulf %63, %60 : vector<16x8xf32>
    %65 = arith.select %62, %60, %64 : vector<16x8xi1>, vector<16x8xf32>
    %c1 = arith.constant 1 : index
    %c0_54 = arith.constant 0 : index
    %c0_55 = arith.constant 0 : index
    %66 = vector.load %arg1[%c1, %c0_54, %c0_55] : memref<3x16x16xf32, #tpu.memory_space<vmem>>, vector<1x16x16xf32>
    %67 = vector.shape_cast %66 : vector<1x16x16xf32> to vector<16x16xf32>
    %c1_56 = arith.constant 1 : index
    %c0_57 = arith.constant 0 : index
    %c0_58 = arith.constant 0 : index
    %68 = vector.load %arg2[%c1_56, %c0_57, %c0_58] : memref<3x16x32xf32, #tpu.memory_space<vmem>>, vector<1x16x32xf32>
    %69 = vector.shape_cast %68 : vector<1x16x32xf32> to vector<16x32xf32>
    %c1_59 = arith.constant 1 : index
    %c0_60 = arith.constant 0 : index
    %c0_61 = arith.constant 0 : index
    %70 = vector.load %arg3[%c1_59, %c0_60, %c0_61] : memref<3x1x32xf32, #tpu.memory_space<vmem>>, vector<1x1x32xf32>
    %71 = vector.shape_cast %70 : vector<1x1x32xf32> to vector<1x32xf32>
    %c1_62 = arith.constant 1 : index
    %c0_63 = arith.constant 0 : index
    %c0_64 = arith.constant 0 : index
    %72 = vector.load %arg4[%c1_62, %c0_63, %c0_64] : memref<3x16x32xf32, #tpu.memory_space<vmem>>, vector<1x16x32xf32>
    %73 = vector.shape_cast %72 : vector<1x16x32xf32> to vector<16x32xf32>
    %c1_65 = arith.constant 1 : index
    %c0_66 = arith.constant 0 : index
    %c0_67 = arith.constant 0 : index
    %74 = vector.load %arg5[%c1_65, %c0_66, %c0_67] : memref<3x1x32xf32, #tpu.memory_space<vmem>>, vector<1x1x32xf32>
    %75 = vector.shape_cast %74 : vector<1x1x32xf32> to vector<1x32xf32>
    %cst_68 = arith.constant dense<0.000000e+00> : vector<16x32xf32>
    %76 = tpu.matmul %0, %73, %cst_68 {dimension_numbers = #tpu.dot_dimension_numbers<[1], [0], [0], [1], [0, 0, 1, 1], [], []>} : vector<16x16xf32>, vector<16x32xf32>, vector<16x32xf32> -> vector<16x32xf32>
    %77 = vector.broadcast %75 : vector<1x32xf32> to vector<16x32xf32>
    %78 = arith.addf %76, %77 : vector<16x32xf32>
    %cst_69 = arith.constant dense<0.000000e+00> : vector<16x16xf32>
    %79 = tpu.matmul %67, %0, %cst_69 {dimension_numbers = #tpu.dot_dimension_numbers<[1], [0], [0], [1], [0, 0, 1, 1], [], []>} : vector<16x16xf32>, vector<16x16xf32>, vector<16x16xf32> -> vector<16x16xf32>
    %cst_70 = arith.constant dense<0.000000e+00> : vector<16x32xf32>
    %80 = tpu.matmul %79, %69, %cst_70 {dimension_numbers = #tpu.dot_dimension_numbers<[1], [0], [0], [1], [0, 0, 1, 1], [], []>} : vector<16x16xf32>, vector<16x32xf32>, vector<16x32xf32> -> vector<16x32xf32>
    %81 = vector.broadcast %71 : vector<1x32xf32> to vector<16x32xf32>
    %82 = arith.addf %80, %81 : vector<16x32xf32>
    %83 = arith.addf %82, %78 : vector<16x32xf32>
    %cst_71 = arith.constant 0.000000e+00 : f32
    %84 = vector.broadcast %cst_71 : f32 to vector<16x32xf32>
    %85 = arith.cmpf oge, %83, %84 : vector<16x32xf32>
    %cst_72 = arith.constant 2.000000e-01 : f32
    %86 = vector.broadcast %cst_72 : f32 to vector<16x32xf32>
    %87 = arith.mulf %86, %83 : vector<16x32xf32>
    %88 = arith.select %85, %83, %87 : vector<16x32xi1>, vector<16x32xf32>
    %c1_73 = arith.constant 1 : index
    %c0_74 = arith.constant 0 : index
    %c0_75 = arith.constant 0 : index
    %89 = vector.load %arg6[%c1_73, %c0_74, %c0_75] : memref<3x32x32xf32, #tpu.memory_space<vmem>>, vector<1x32x32xf32>
    %90 = vector.shape_cast %89 : vector<1x32x32xf32> to vector<32x32xf32>
    %c1_76 = arith.constant 1 : index
    %c0_77 = arith.constant 0 : index
    %c0_78 = arith.constant 0 : index
    %91 = vector.load %arg7[%c1_76, %c0_77, %c0_78] : memref<3x1x32xf32, #tpu.memory_space<vmem>>, vector<1x1x32xf32>
    %92 = vector.shape_cast %91 : vector<1x1x32xf32> to vector<1x32xf32>
    %c1_79 = arith.constant 1 : index
    %c0_80 = arith.constant 0 : index
    %c0_81 = arith.constant 0 : index
    %93 = vector.load %arg8[%c1_79, %c0_80, %c0_81] : memref<3x32x32xf32, #tpu.memory_space<vmem>>, vector<1x32x32xf32>
    %94 = vector.shape_cast %93 : vector<1x32x32xf32> to vector<32x32xf32>
    %c1_82 = arith.constant 1 : index
    %c0_83 = arith.constant 0 : index
    %c0_84 = arith.constant 0 : index
    %95 = vector.load %arg9[%c1_82, %c0_83, %c0_84] : memref<3x1x32xf32, #tpu.memory_space<vmem>>, vector<1x1x32xf32>
    %96 = vector.shape_cast %95 : vector<1x1x32xf32> to vector<1x32xf32>
    %cst_85 = arith.constant dense<0.000000e+00> : vector<16x32xf32>
    %97 = tpu.matmul %88, %94, %cst_85 {dimension_numbers = #tpu.dot_dimension_numbers<[1], [0], [0], [1], [0, 0, 1, 1], [], []>} : vector<16x32xf32>, vector<32x32xf32>, vector<16x32xf32> -> vector<16x32xf32>
    %98 = vector.broadcast %96 : vector<1x32xf32> to vector<16x32xf32>
    %99 = arith.addf %97, %98 : vector<16x32xf32>
    %cst_86 = arith.constant dense<0.000000e+00> : vector<16x32xf32>
    %100 = tpu.matmul %67, %88, %cst_86 {dimension_numbers = #tpu.dot_dimension_numbers<[1], [0], [0], [1], [0, 0, 1, 1], [], []>} : vector<16x16xf32>, vector<16x32xf32>, vector<16x32xf32> -> vector<16x32xf32>
    %cst_87 = arith.constant dense<0.000000e+00> : vector<16x32xf32>
    %101 = tpu.matmul %100, %90, %cst_87 {dimension_numbers = #tpu.dot_dimension_numbers<[1], [0], [0], [1], [0, 0, 1, 1], [], []>} : vector<16x32xf32>, vector<32x32xf32>, vector<16x32xf32> -> vector<16x32xf32>
    %102 = vector.broadcast %92 : vector<1x32xf32> to vector<16x32xf32>
    %103 = arith.addf %101, %102 : vector<16x32xf32>
    %104 = arith.addf %103, %99 : vector<16x32xf32>
    %cst_88 = arith.constant 0.000000e+00 : f32
    %105 = vector.broadcast %cst_88 : f32 to vector<16x32xf32>
    %106 = arith.cmpf oge, %104, %105 : vector<16x32xf32>
    %cst_89 = arith.constant 2.000000e-01 : f32
    %107 = vector.broadcast %cst_89 : f32 to vector<16x32xf32>
    %108 = arith.mulf %107, %104 : vector<16x32xf32>
    %109 = arith.select %106, %104, %108 : vector<16x32xi1>, vector<16x32xf32>
    %c1_90 = arith.constant 1 : index
    %c0_91 = arith.constant 0 : index
    %c0_92 = arith.constant 0 : index
    %110 = vector.load %arg10[%c1_90, %c0_91, %c0_92] : memref<3x32x8xf32, #tpu.memory_space<vmem>>, vector<1x32x8xf32>
    %111 = vector.shape_cast %110 : vector<1x32x8xf32> to vector<32x8xf32>
    %c1_93 = arith.constant 1 : index
    %c0_94 = arith.constant 0 : index
    %c0_95 = arith.constant 0 : index
    %112 = vector.load %arg11[%c1_93, %c0_94, %c0_95] : memref<3x1x8xf32, #tpu.memory_space<vmem>>, vector<1x1x8xf32>
    %113 = vector.shape_cast %112 : vector<1x1x8xf32> to vector<1x8xf32>
    %c1_96 = arith.constant 1 : index
    %c0_97 = arith.constant 0 : index
    %c0_98 = arith.constant 0 : index
    %114 = vector.load %arg12[%c1_96, %c0_97, %c0_98] : memref<3x32x8xf32, #tpu.memory_space<vmem>>, vector<1x32x8xf32>
    %115 = vector.shape_cast %114 : vector<1x32x8xf32> to vector<32x8xf32>
    %c1_99 = arith.constant 1 : index
    %c0_100 = arith.constant 0 : index
    %c0_101 = arith.constant 0 : index
    %116 = vector.load %arg13[%c1_99, %c0_100, %c0_101] : memref<3x1x8xf32, #tpu.memory_space<vmem>>, vector<1x1x8xf32>
    %117 = vector.shape_cast %116 : vector<1x1x8xf32> to vector<1x8xf32>
    %cst_102 = arith.constant dense<0.000000e+00> : vector<16x8xf32>
    %118 = tpu.matmul %109, %115, %cst_102 {dimension_numbers = #tpu.dot_dimension_numbers<[1], [0], [0], [1], [0, 0, 1, 1], [], []>} : vector<16x32xf32>, vector<32x8xf32>, vector<16x8xf32> -> vector<16x8xf32>
    %119 = vector.broadcast %117 : vector<1x8xf32> to vector<16x8xf32>
    %120 = arith.addf %118, %119 : vector<16x8xf32>
    %cst_103 = arith.constant dense<0.000000e+00> : vector<16x8xf32>
    %121 = tpu.matmul %109, %111, %cst_103 {dimension_numbers = #tpu.dot_dimension_numbers<[1], [0], [0], [1], [0, 0, 1, 1], [], []>} : vector<16x32xf32>, vector<32x8xf32>, vector<16x8xf32> -> vector<16x8xf32>
    %cst_104 = arith.constant dense<0.000000e+00> : vector<16x8xf32>
    %122 = tpu.matmul %67, %121, %cst_104 {dimension_numbers = #tpu.dot_dimension_numbers<[1], [0], [0], [1], [0, 0, 1, 1], [], []>} : vector<16x16xf32>, vector<16x8xf32>, vector<16x8xf32> -> vector<16x8xf32>
    %123 = vector.broadcast %113 : vector<1x8xf32> to vector<16x8xf32>
    %124 = arith.addf %122, %123 : vector<16x8xf32>
    %125 = arith.addf %124, %120 : vector<16x8xf32>
    %cst_105 = arith.constant 0.000000e+00 : f32
    %126 = vector.broadcast %cst_105 : f32 to vector<16x8xf32>
    %127 = arith.cmpf oge, %125, %126 : vector<16x8xf32>
    %cst_106 = arith.constant 2.000000e-01 : f32
    %128 = vector.broadcast %cst_106 : f32 to vector<16x8xf32>
    %129 = arith.mulf %128, %125 : vector<16x8xf32>
    %130 = arith.select %127, %125, %129 : vector<16x8xi1>, vector<16x8xf32>
    %131 = arith.addf %65, %130 : vector<16x8xf32>
    %c2 = arith.constant 2 : index
    %c0_107 = arith.constant 0 : index
    %c0_108 = arith.constant 0 : index
    %132 = vector.load %arg1[%c2, %c0_107, %c0_108] : memref<3x16x16xf32, #tpu.memory_space<vmem>>, vector<1x16x16xf32>
    %133 = vector.shape_cast %132 : vector<1x16x16xf32> to vector<16x16xf32>
    %c2_109 = arith.constant 2 : index
    %c0_110 = arith.constant 0 : index
    %c0_111 = arith.constant 0 : index
    %134 = vector.load %arg2[%c2_109, %c0_110, %c0_111] : memref<3x16x32xf32, #tpu.memory_space<vmem>>, vector<1x16x32xf32>
    %135 = vector.shape_cast %134 : vector<1x16x32xf32> to vector<16x32xf32>
    %c2_112 = arith.constant 2 : index
    %c0_113 = arith.constant 0 : index
    %c0_114 = arith.constant 0 : index
    %136 = vector.load %arg3[%c2_112, %c0_113, %c0_114] : memref<3x1x32xf32, #tpu.memory_space<vmem>>, vector<1x1x32xf32>
    %137 = vector.shape_cast %136 : vector<1x1x32xf32> to vector<1x32xf32>
    %c2_115 = arith.constant 2 : index
    %c0_116 = arith.constant 0 : index
    %c0_117 = arith.constant 0 : index
    %138 = vector.load %arg4[%c2_115, %c0_116, %c0_117] : memref<3x16x32xf32, #tpu.memory_space<vmem>>, vector<1x16x32xf32>
    %139 = vector.shape_cast %138 : vector<1x16x32xf32> to vector<16x32xf32>
    %c2_118 = arith.constant 2 : index
    %c0_119 = arith.constant 0 : index
    %c0_120 = arith.constant 0 : index
    %140 = vector.load %arg5[%c2_118, %c0_119, %c0_120] : memref<3x1x32xf32, #tpu.memory_space<vmem>>, vector<1x1x32xf32>
    %141 = vector.shape_cast %140 : vector<1x1x32xf32> to vector<1x32xf32>
    %cst_121 = arith.constant dense<0.000000e+00> : vector<16x32xf32>
    %142 = tpu.matmul %0, %139, %cst_121 {dimension_numbers = #tpu.dot_dimension_numbers<[1], [0], [0], [1], [0, 0, 1, 1], [], []>} : vector<16x16xf32>, vector<16x32xf32>, vector<16x32xf32> -> vector<16x32xf32>
    %143 = vector.broadcast %141 : vector<1x32xf32> to vector<16x32xf32>
    %144 = arith.addf %142, %143 : vector<16x32xf32>
    %cst_122 = arith.constant dense<0.000000e+00> : vector<16x16xf32>
    %145 = tpu.matmul %133, %0, %cst_122 {dimension_numbers = #tpu.dot_dimension_numbers<[1], [0], [0], [1], [0, 0, 1, 1], [], []>} : vector<16x16xf32>, vector<16x16xf32>, vector<16x16xf32> -> vector<16x16xf32>
    %cst_123 = arith.constant dense<0.000000e+00> : vector<16x32xf32>
    %146 = tpu.matmul %145, %135, %cst_123 {dimension_numbers = #tpu.dot_dimension_numbers<[1], [0], [0], [1], [0, 0, 1, 1], [], []>} : vector<16x16xf32>, vector<16x32xf32>, vector<16x32xf32> -> vector<16x32xf32>
    %147 = vector.broadcast %137 : vector<1x32xf32> to vector<16x32xf32>
    %148 = arith.addf %146, %147 : vector<16x32xf32>
    %149 = arith.addf %148, %144 : vector<16x32xf32>
    %cst_124 = arith.constant 0.000000e+00 : f32
    %150 = vector.broadcast %cst_124 : f32 to vector<16x32xf32>
    %151 = arith.cmpf oge, %149, %150 : vector<16x32xf32>
    %cst_125 = arith.constant 2.000000e-01 : f32
    %152 = vector.broadcast %cst_125 : f32 to vector<16x32xf32>
    %153 = arith.mulf %152, %149 : vector<16x32xf32>
    %154 = arith.select %151, %149, %153 : vector<16x32xi1>, vector<16x32xf32>
    %c2_126 = arith.constant 2 : index
    %c0_127 = arith.constant 0 : index
    %c0_128 = arith.constant 0 : index
    %155 = vector.load %arg6[%c2_126, %c0_127, %c0_128] : memref<3x32x32xf32, #tpu.memory_space<vmem>>, vector<1x32x32xf32>
    %156 = vector.shape_cast %155 : vector<1x32x32xf32> to vector<32x32xf32>
    %c2_129 = arith.constant 2 : index
    %c0_130 = arith.constant 0 : index
    %c0_131 = arith.constant 0 : index
    %157 = vector.load %arg7[%c2_129, %c0_130, %c0_131] : memref<3x1x32xf32, #tpu.memory_space<vmem>>, vector<1x1x32xf32>
    %158 = vector.shape_cast %157 : vector<1x1x32xf32> to vector<1x32xf32>
    %c2_132 = arith.constant 2 : index
    %c0_133 = arith.constant 0 : index
    %c0_134 = arith.constant 0 : index
    %159 = vector.load %arg8[%c2_132, %c0_133, %c0_134] : memref<3x32x32xf32, #tpu.memory_space<vmem>>, vector<1x32x32xf32>
    %160 = vector.shape_cast %159 : vector<1x32x32xf32> to vector<32x32xf32>
    %c2_135 = arith.constant 2 : index
    %c0_136 = arith.constant 0 : index
    %c0_137 = arith.constant 0 : index
    %161 = vector.load %arg9[%c2_135, %c0_136, %c0_137] : memref<3x1x32xf32, #tpu.memory_space<vmem>>, vector<1x1x32xf32>
    %162 = vector.shape_cast %161 : vector<1x1x32xf32> to vector<1x32xf32>
    %cst_138 = arith.constant dense<0.000000e+00> : vector<16x32xf32>
    %163 = tpu.matmul %154, %160, %cst_138 {dimension_numbers = #tpu.dot_dimension_numbers<[1], [0], [0], [1], [0, 0, 1, 1], [], []>} : vector<16x32xf32>, vector<32x32xf32>, vector<16x32xf32> -> vector<16x32xf32>
    %164 = vector.broadcast %162 : vector<1x32xf32> to vector<16x32xf32>
    %165 = arith.addf %163, %164 : vector<16x32xf32>
    %cst_139 = arith.constant dense<0.000000e+00> : vector<16x32xf32>
    %166 = tpu.matmul %133, %154, %cst_139 {dimension_numbers = #tpu.dot_dimension_numbers<[1], [0], [0], [1], [0, 0, 1, 1], [], []>} : vector<16x16xf32>, vector<16x32xf32>, vector<16x32xf32> -> vector<16x32xf32>
    %cst_140 = arith.constant dense<0.000000e+00> : vector<16x32xf32>
    %167 = tpu.matmul %166, %156, %cst_140 {dimension_numbers = #tpu.dot_dimension_numbers<[1], [0], [0], [1], [0, 0, 1, 1], [], []>} : vector<16x32xf32>, vector<32x32xf32>, vector<16x32xf32> -> vector<16x32xf32>
    %168 = vector.broadcast %158 : vector<1x32xf32> to vector<16x32xf32>
    %169 = arith.addf %167, %168 : vector<16x32xf32>
    %170 = arith.addf %169, %165 : vector<16x32xf32>
    %cst_141 = arith.constant 0.000000e+00 : f32
    %171 = vector.broadcast %cst_141 : f32 to vector<16x32xf32>
    %172 = arith.cmpf oge, %170, %171 : vector<16x32xf32>
    %cst_142 = arith.constant 2.000000e-01 : f32
    %173 = vector.broadcast %cst_142 : f32 to vector<16x32xf32>
    %174 = arith.mulf %173, %170 : vector<16x32xf32>
    %175 = arith.select %172, %170, %174 : vector<16x32xi1>, vector<16x32xf32>
    %c2_143 = arith.constant 2 : index
    %c0_144 = arith.constant 0 : index
    %c0_145 = arith.constant 0 : index
    %176 = vector.load %arg10[%c2_143, %c0_144, %c0_145] : memref<3x32x8xf32, #tpu.memory_space<vmem>>, vector<1x32x8xf32>
    %177 = vector.shape_cast %176 : vector<1x32x8xf32> to vector<32x8xf32>
    %c2_146 = arith.constant 2 : index
    %c0_147 = arith.constant 0 : index
    %c0_148 = arith.constant 0 : index
    %178 = vector.load %arg11[%c2_146, %c0_147, %c0_148] : memref<3x1x8xf32, #tpu.memory_space<vmem>>, vector<1x1x8xf32>
    %179 = vector.shape_cast %178 : vector<1x1x8xf32> to vector<1x8xf32>
    %c2_149 = arith.constant 2 : index
    %c0_150 = arith.constant 0 : index
    %c0_151 = arith.constant 0 : index
    %180 = vector.load %arg12[%c2_149, %c0_150, %c0_151] : memref<3x32x8xf32, #tpu.memory_space<vmem>>, vector<1x32x8xf32>
    %181 = vector.shape_cast %180 : vector<1x32x8xf32> to vector<32x8xf32>
    %c2_152 = arith.constant 2 : index
    %c0_153 = arith.constant 0 : index
    %c0_154 = arith.constant 0 : index
    %182 = vector.load %arg13[%c2_152, %c0_153, %c0_154] : memref<3x1x8xf32, #tpu.memory_space<vmem>>, vector<1x1x8xf32>
    %183 = vector.shape_cast %182 : vector<1x1x8xf32> to vector<1x8xf32>
    %cst_155 = arith.constant dense<0.000000e+00> : vector<16x8xf32>
    %184 = tpu.matmul %175, %181, %cst_155 {dimension_numbers = #tpu.dot_dimension_numbers<[1], [0], [0], [1], [0, 0, 1, 1], [], []>} : vector<16x32xf32>, vector<32x8xf32>, vector<16x8xf32> -> vector<16x8xf32>
    %185 = vector.broadcast %183 : vector<1x8xf32> to vector<16x8xf32>
    %186 = arith.addf %184, %185 : vector<16x8xf32>
    %cst_156 = arith.constant dense<0.000000e+00> : vector<16x8xf32>
    %187 = tpu.matmul %175, %177, %cst_156 {dimension_numbers = #tpu.dot_dimension_numbers<[1], [0], [0], [1], [0, 0, 1, 1], [], []>} : vector<16x32xf32>, vector<32x8xf32>, vector<16x8xf32> -> vector<16x8xf32>
    %cst_157 = arith.constant dense<0.000000e+00> : vector<16x8xf32>
    %188 = tpu.matmul %133, %187, %cst_157 {dimension_numbers = #tpu.dot_dimension_numbers<[1], [0], [0], [1], [0, 0, 1, 1], [], []>} : vector<16x16xf32>, vector<16x8xf32>, vector<16x8xf32> -> vector<16x8xf32>
    %189 = vector.broadcast %179 : vector<1x8xf32> to vector<16x8xf32>
    %190 = arith.addf %188, %189 : vector<16x8xf32>
    %191 = arith.addf %190, %186 : vector<16x8xf32>
    %cst_158 = arith.constant 0.000000e+00 : f32
    %192 = vector.broadcast %cst_158 : f32 to vector<16x8xf32>
    %193 = arith.cmpf oge, %191, %192 : vector<16x8xf32>
    %cst_159 = arith.constant 2.000000e-01 : f32
    %194 = vector.broadcast %cst_159 : f32 to vector<16x8xf32>
    %195 = arith.mulf %194, %191 : vector<16x8xf32>
    %196 = arith.select %193, %191, %195 : vector<16x8xi1>, vector<16x8xf32>
    %197 = arith.addf %131, %196 : vector<16x8xf32>
    %c0_160 = arith.constant 0 : index
    %c0_161 = arith.constant 0 : index
    %198 = vector.load %arg14[%c0_160, %c0_161] : memref<16x8xf32, #tpu.memory_space<vmem>>, vector<16x8xf32>
    tpu.vector_store %arg14[%c0_160, %c0_161], %197 {strides = array<i32>} : memref<16x8xf32, #tpu.memory_space<vmem>>, vector<16x8xf32>,
    return
  }
}

</mosaic_0001>

<llo_original>
// kernel: tpu_custom_call.1
$region0: #{tpu_custom_call.1}
  #allocation0 [shape = 'u32[]', space=smem, size = 0x4, offset = 0x4, fixed_abs, tag = 'smem constant byte address 0x4 - core index']
  #allocation1 [shape = 'u32[144,128]{1,0:T(1,128)}', space=vmem, size = 0x12000, scoped, tag = 'internal scratch']
  %s0 = inlined_call_operand.hbm [shape: f32[16,16], index: 0, kind: input, shape index: {}]
  %s1 = inlined_call_operand.vmem [shape: f32[3,16,16], index: 1, kind: input, shape index: {}]
  %s2 = inlined_call_operand.hbm [shape: f32[3,16,32], index: 2, kind: input, shape index: {}]
  %s3 = inlined_call_operand.vmem [shape: f32[3,1,32], index: 3, kind: input, shape index: {}]
  %s4 = inlined_call_operand.hbm [shape: f32[3,16,32], index: 4, kind: input, shape index: {}]
  %s5 = inlined_call_operand.vmem [shape: f32[3,1,32], index: 5, kind: input, shape index: {}]
  %s6 = inlined_call_operand.vmem [shape: f32[3,32,32], index: 6, kind: input, shape index: {}]
  %s7 = inlined_call_operand.vmem [shape: f32[3,1,32], index: 7, kind: input, shape index: {}]
  %s8 = inlined_call_operand.vmem [shape: f32[3,32,32], index: 8, kind: input, shape index: {}]
  %s9 = inlined_call_operand.vmem [shape: f32[3,1,32], index: 9, kind: input, shape index: {}]
  %s10 = inlined_call_operand.vmem [shape: f32[3,32,8], index: 10, kind: input, shape index: {}]
  %s11 = inlined_call_operand.vmem [shape: f32[3,1,8], index: 11, kind: input, shape index: {}]
  %s12 = inlined_call_operand.vmem [shape: f32[3,32,8], index: 12, kind: input, shape index: {}]
  %s13 = inlined_call_operand.vmem [shape: f32[3,1,8], index: 13, kind: input, shape index: {}]
  %s14 = inlined_call_operand.vmem [shape: f32[16,8], index: 14, kind: output, shape index: {}]
  %s15 = sld [smem:[#allocation0]]
  $region78: #{tpu_custom_call.1} parent=0
    _
  %s17 = ssub.s32 1, %s15
  %s18 = scalar_select 0, %s17, %s15
  $region1: #{tpu_custom_call.1} parent=0
    #allocation2 [shape = 'u8[8192]{0}', space=vmem, size = 0x2000, scoped, tag = 'input window, operand 0, single buffered']
    #allocation3 [shape = 's32[1]{0}', space=sflag, size = 0x4, scoped, tag = 'scoped memory for tpu_custom_call.1']
    #allocation4 [shape = 'u8[24576]{0}', space=vmem, size = 0x6000, scoped, tag = 'input window, operand 2, single buffered']
    #allocation5 [shape = 's32[1]{0}', space=sflag, size = 0x4, scoped, tag = 'scoped memory for tpu_custom_call.1']
    #allocation6 [shape = 'u8[24576]{0}', space=vmem, size = 0x6000, scoped, tag = 'input window, operand 4, single buffered']
    %19 = vsyncpa [#allocation3], 0
    %20 = vsyncpa [#allocation5], 0
    // Predicated region
    $region2: #{tpu_custom_call.1} parent=1 // pred_check
      _
    $region3: #{tpu_custom_call.1} parent=1 // pred_check_branch
      %22 = sbr.rel (0) target = $region5
    $region4: #{tpu_custom_call.1} parent=1 // pred_region
      %s24 = ssub.s32 256, 256
      %25 = vsyncadd [#allocation3], %s24
      %s26 = sshll.u32 [#allocation2], 4
      %s27 = int_to_ptr.vmem [resolvable:$true] %s26
      %32 = dma.hbm_to_vmem [thread:$0]  %s0, 256, %s27, [#allocation3], 128, 128, 8
    $region5: #{tpu_custom_call.1} parent=1 // pred_fallthru
      _
    // Predicated region
    $region6: #{tpu_custom_call.1} parent=1 // pred_check
      _
    $region7: #{tpu_custom_call.1} parent=1 // pred_check_branch
      %34 = sbr.rel (0) target = $region9
    $region8: #{tpu_custom_call.1} parent=1 // pred_region
      _
    $region9: #{tpu_custom_call.1} parent=1 // pred_fallthru
      _
    // Predicated region
    $region10: #{tpu_custom_call.1} parent=1 // pred_check
      _
    $region11: #{tpu_custom_call.1} parent=1 // pred_check_branch
      %36 = sbr.rel (0) target = $region13
    $region12: #{tpu_custom_call.1} parent=1 // pred_region
      %s38 = ssub.s32 768, 768
      %39 = vsyncadd [#allocation5], %s38
      %s40 = sshll.u32 [#allocation4], 4
      %s41 = int_to_ptr.vmem [resolvable:$true] %s40
      %46 = dma.hbm_to_vmem [thread:$0]  %s2, 768, %s41, [#allocation5], 128, 128, 8
    $region13: #{tpu_custom_call.1} parent=1 // pred_fallthru
      _
    // Predicated region
    $region14: #{tpu_custom_call.1} parent=1 // pred_check
      _
    $region15: #{tpu_custom_call.1} parent=1 // pred_check_branch
      %48 = sbr.rel (0) target = $region17
    $region16: #{tpu_custom_call.1} parent=1 // pred_region
      _
    $region17: #{tpu_custom_call.1} parent=1 // pred_fallthru
      _
    // Predicated region
    $region18: #{tpu_custom_call.1} parent=1 // pred_check
      _
    $region19: #{tpu_custom_call.1} parent=1 // pred_check_branch
      %50 = sbr.rel (0) target = $region21
    $region20: #{tpu_custom_call.1} parent=1 // pred_region
      %s52 = ssub.s32 768, 768
      %53 = vsyncadd [#allocation5], %s52
      %s54 = sshll.u32 [#allocation6], 4
      %s55 = int_to_ptr.vmem [resolvable:$true] %s54
      %60 = dma.hbm_to_vmem [thread:$0]  %s4, 768, %s55, [#allocation5], 128, 128, 8
    $region21: #{tpu_custom_call.1} parent=1 // pred_fallthru
      _
    // Predicated region
    $region22: #{tpu_custom_call.1} parent=1 // pred_check
      _
    $region23: #{tpu_custom_call.1} parent=1 // pred_check_branch
      %62 = sbr.rel (0) target = $region25
    $region24: #{tpu_custom_call.1} parent=1 // pred_region
      _
    $region25: #{tpu_custom_call.1} parent=1 // pred_fallthru
      _
    // Predicated region
    $region26: #{tpu_custom_call.1} parent=1 // pred_check
      _
    $region27: #{tpu_custom_call.1} parent=1 // pred_check_branch
      %64 = sbr.rel (0) target = $region29
    $region28: #{tpu_custom_call.1} parent=1 // pred_region
      _
    $region29: #{tpu_custom_call.1} parent=1 // pred_fallthru
      _
    // Predicated region
    $region30: #{tpu_custom_call.1} parent=1 // pred_check
      _
    $region31: #{tpu_custom_call.1} parent=1 // pred_check_branch
      %66 = sbr.rel (0) target = $region33
    $region32: #{tpu_custom_call.1} parent=1 // pred_region
      _
    $region33: #{tpu_custom_call.1} parent=1 // pred_fallthru
      _
    // Predicated region
    $region34: #{tpu_custom_call.1} parent=1 // pred_check
      _
    $region35: #{tpu_custom_call.1} parent=1 // pred_check_branch
      %68 = sbr.rel (0) target = $region37
    $region36: #{tpu_custom_call.1} parent=1 // pred_region
      _
    $region37: #{tpu_custom_call.1} parent=1 // pred_fallthru
      _
    // Predicated region
    $region38: #{tpu_custom_call.1} parent=1 // pred_check
      _
    $region39: #{tpu_custom_call.1} parent=1 // pred_check_branch
      %70 = sbr.rel (0) target = $region41
    $region40: #{tpu_custom_call.1} parent=1 // pred_region
      _
    $region41: #{tpu_custom_call.1} parent=1 // pred_fallthru
      _
    // Predicated region
    $region42: #{tpu_custom_call.1} parent=1 // pred_check
      _
    $region43: #{tpu_custom_call.1} parent=1 // pred_check_branch
      %72 = sbr.rel (0) target = $region45
    $region44: #{tpu_custom_call.1} parent=1 // pred_region
      _
    $region45: #{tpu_custom_call.1} parent=1 // pred_fallthru
      _
    // Predicated region
    $region46: #{tpu_custom_call.1} parent=1 // pred_check
      _
    $region47: #{tpu_custom_call.1} parent=1 // pred_check_branch
      %74 = sbr.rel (0) target = $region49
    $region48: #{tpu_custom_call.1} parent=1 // pred_region
      _
    $region49: #{tpu_custom_call.1} parent=1 // pred_fallthru
      _
    // Predicated region
    $region50: #{tpu_custom_call.1} parent=1 // pred_check
      _
    $region51: #{tpu_custom_call.1} parent=1 // pred_check_branch
      %76 = sbr.rel (0) target = $region53
    $region52: #{tpu_custom_call.1} parent=1 // pred_region
      _
    $region53: #{tpu_custom_call.1} parent=1 // pred_fallthru
      _
    // Predicated region
    $region54: #{tpu_custom_call.1} parent=1 // pred_check
      _
    $region55: #{tpu_custom_call.1} parent=1 // pred_check_branch
      %78 = sbr.rel (0) target = $region57
    $region56: #{tpu_custom_call.1} parent=1 // pred_region
      _
    $region57: #{tpu_custom_call.1} parent=1 // pred_fallthru
      _
    // Predicated region
    $region58: #{tpu_custom_call.1} parent=1 // pred_check
      _
    $region59: #{tpu_custom_call.1} parent=1 // pred_check_branch
      %80 = sbr.rel (0) target = $region61
    $region60: #{tpu_custom_call.1} parent=1 // pred_region
      %81 = dma.done [#allocation3], 256
    $region61: #{tpu_custom_call.1} parent=1 // pred_fallthru
      _
    // Predicated region
    $region62: #{tpu_custom_call.1} parent=1 // pred_check
      _
    $region63: #{tpu_custom_call.1} parent=1 // pred_check_branch
      %83 = sbr.rel (0) target = $region65
    $region64: #{tpu_custom_call.1} parent=1 // pred_region
      %84 = dma.done [#allocation5], 768
    $region65: #{tpu_custom_call.1} parent=1 // pred_fallthru
      _
    // Predicated region
    $region66: #{tpu_custom_call.1} parent=1 // pred_check
      _
    $region67: #{tpu_custom_call.1} parent=1 // pred_check_branch
      %86 = sbr.rel (0) target = $region69
    $region68: #{tpu_custom_call.1} parent=1 // pred_region
      %87 = dma.done [#allocation5], 768
    $region69: #{tpu_custom_call.1} parent=1 // pred_fallthru
      _
    %v88 = vld [vmem:[#allocation2] sm:$0xff]
    %v89 = vld [vmem:[#allocation2 + $0x8] sm:$0xff]
    %v90 = vld [vmem:[%s1] sm:$0xff]
    %v91 = vld [vmem:[%s1 + $0x8] sm:$0xff]
    %v92 = vld [vmem:[#allocation4] sm:$0xff]
    %v93 = vld [vmem:[#allocation4 + $0x8] sm:$0xff]
    %v94 = vld [vmem:[%s3] sm:$0x1]
    %v95 = vld [vmem:[#allocation6] sm:$0xff]
    %v96 = vld [vmem:[#allocation6 + $0x8] sm:$0xff]
    %v97 = vld [vmem:[%s5] sm:$0x1]
    %v99 = vlaneseq
    %v100 = vshrl.u32 %v99, 7
    %v101 = vsub.s32 0, %v100
    %v102 = vrot.slane %v97, %v101
    %vm104 = vcmask 130048
    %v106 = vsel %vm104, %v88, 0
    %v109 = vsel %vm104, %v89, 0
    %111 = vmatprep.subr.mxu0 0.0
    %112 = vmatpush1.msra.mxu0 0.0
    %113 = vmatprep.subr.mxu0 0.0
    %114 = vmatpush1.msra.mxu0 0.0
    %115 = vmatprep.subr.mxu0 0.0
    %116 = vmatpush1.msra.mxu0 0.0
    %117 = vmatprep.subr.mxu0 0.0
    %118 = vmatpush1.msra.mxu0 0.0
    %119 = vmatprep.subr.mxu0 0.0
    %120 = vmatpush1.msra.mxu0 0.0
    %121 = vmatprep.subr.mxu0 0.0
    %122 = vmatpush1.msra.mxu0 0.0
    %123 = vmatprep.subr.mxu0 0.0
    %124 = vmatpush1.msra.mxu0 0.0
    %125 = vmatprep.subr.mxu0 0.0
    %126 = vmatpush1.msra.mxu0 0.0
    %127 = vmatprep.subr.mxu0 0.0
    %128 = vmatpush1.msra.mxu0 0.0
    %129 = vmatprep.subr.mxu0 0.0
    %130 = vmatpush1.msra.mxu0 0.0
    %131 = vmatprep.subr.mxu0 0.0
    %132 = vmatpush1.msra.mxu0 0.0
    %133 = vmatprep.subr.mxu0 0.0
    %134 = vmatpush1.msra.mxu0 0.0
    %135 = vmatprep.subr.mxu0 0.0
    %136 = vmatpush1.msra.mxu0 0.0
    %137 = vmatprep.subr.mxu0 0.0
    %138 = vmatpush1.msra.mxu0 0.0
    %139 = vmatprep.subr.mxu0 0.0
    %140 = vmatpush1.msra.mxu0 %v96
    %141 = vmatprep.subr.mxu0 0.0
    %142 = vmatpush1.msra.mxu0 %v95
    %143 = vmatprep.subr.mxu0 0.0
    %144 = vmatpush2.msra.mxu0 0.0
    %145 = vmatprep.subr.mxu0 0.0
    %146 = vmatpush2.msra.mxu0 0.0
    %147 = vmatprep.subr.mxu0 0.0
    %148 = vmatpush2.msra.mxu0 0.0
    %149 = vmatprep.subr.mxu0 0.0
    %150 = vmatpush2.msra.mxu0 0.0
    %151 = vmatprep.subr.mxu0 0.0
    %152 = vmatpush2.msra.mxu0 0.0
    %153 = vmatprep.subr.mxu0 0.0
    %154 = vmatpush2.msra.mxu0 0.0
    %155 = vmatprep.subr.mxu0 0.0
    %156 = vmatpush2.msra.mxu0 0.0
    %157 = vmatprep.subr.mxu0 0.0
    %158 = vmatpush2.msra.mxu0 0.0
    %159 = vmatprep.subr.mxu0 0.0
    %160 = vmatpush2.msra.mxu0 0.0
    %161 = vmatprep.subr.mxu0 0.0
    %162 = vmatpush2.msra.mxu0 0.0
    %163 = vmatprep.subr.mxu0 0.0
    %164 = vmatpush2.msra.mxu0 0.0
    %165 = vmatprep.subr.mxu0 0.0
    %166 = vmatpush2.msra.mxu0 0.0
    %167 = vmatprep.subr.mxu0 0.0
    %168 = vmatpush2.msra.mxu0 0.0
    %169 = vmatprep.subr.mxu0 0.0
    %170 = vmatpush2.msra.mxu0 0.0
    %171 = vmatprep.subr.mxu0 0.0
    %172 = vmatpush2.msra.mxu0 0.0
    %173 = vmatprep.subr.mxu0 0.0
    %174 = vmatpush2.msra.mxu0 0.0
    %175 = vmatprep.mubr.f32.mxu0 0.0
    %176 = vmatmul.mubr.f32.gmra.mxu0 %v106
    %v177 = vpop.f32.mrf.mxu0
    %v178 = vadd.f32 %v102, %v177
    %v179 = vpop.f32.mrf.mxu0
    %180 = vmatprep.mubr.f32.mxu0 0.0
    %181 = vmatmul.mubr.f32.gmra.mxu0 %v109
    %v182 = vpop.f32.mrf.mxu0
    %v183 = vadd.f32 %v102, %v182
    %v184 = vpop.f32.mrf.mxu0
    %185 = vdwg.mxu0
    %v187 = vsel %vm104, %v90, 0
    %v190 = vsel %vm104, %v91, 0
    %192 = vmatprep.subr.mxu0 0.0
    %193 = vmatpush1.msra.mxu0 0.0
    %194 = vmatprep.subr.mxu0 0.0
    %195 = vmatpush1.msra.mxu0 0.0
    %196 = vmatprep.subr.mxu0 0.0
    %197 = vmatpush1.msra.mxu0 0.0
    %198 = vmatprep.subr.mxu0 0.0
    %199 = vmatpush1.msra.mxu0 0.0
    %200 = vmatprep.subr.mxu0 0.0
    %201 = vmatpush1.msra.mxu0 0.0
    %202 = vmatprep.subr.mxu0 0.0
    %203 = vmatpush1.msra.mxu0 0.0
    %204 = vmatprep.subr.mxu0 0.0
    %205 = vmatpush1.msra.mxu0 0.0
    %206 = vmatprep.subr.mxu0 0.0
    %207 = vmatpush1.msra.mxu0 0.0
    %208 = vmatprep.subr.mxu0 0.0
    %209 = vmatpush1.msra.mxu0 0.0
    %210 = vmatprep.subr.mxu0 0.0
    %211 = vmatpush1.msra.mxu0 0.0
    %212 = vmatprep.subr.mxu0 0.0
    %213 = vmatpush1.msra.mxu0 0.0
    %214 = vmatprep.subr.mxu0 0.0
    %215 = vmatpush1.msra.mxu0 0.0
    %216 = vmatprep.subr.mxu0 0.0
    %217 = vmatpush1.msra.mxu0 0.0
    %218 = vmatprep.subr.mxu0 0.0
    %219 = vmatpush1.msra.mxu0 0.0
    %220 = vmatprep.subr.mxu0 0.0
    %221 = vmatpush1.msra.mxu0 %v89
    %222 = vmatprep.subr.mxu0 0.0
    %223 = vmatpush1.msra.mxu0 %v88
    %224 = vmatprep.subr.mxu0 0.0
    %225 = vmatpush2.msra.mxu0 0.0
    %226 = vmatprep.subr.mxu0 0.0
    %227 = vmatpush2.msra.mxu0 0.0
    %228 = vmatprep.subr.mxu0 0.0
    %229 = vmatpush2.msra.mxu0 0.0
    %230 = vmatprep.subr.mxu0 0.0
    %231 = vmatpush2.msra.mxu0 0.0
    %232 = vmatprep.subr.mxu0 0.0
    %233 = vmatpush2.msra.mxu0 0.0
    %234 = vmatprep.subr.mxu0 0.0
    %235 = vmatpush2.msra.mxu0 0.0
    %236 = vmatprep.subr.mxu0 0.0
    %237 = vmatpush2.msra.mxu0 0.0
    %238 = vmatprep.subr.mxu0 0.0
    %239 = vmatpush2.msra.mxu0 0.0
    %240 = vmatprep.subr.mxu0 0.0
    %241 = vmatpush2.msra.mxu0 0.0
    %242 = vmatprep.subr.mxu0 0.0
    %243 = vmatpush2.msra.mxu0 0.0
    %244 = vmatprep.subr.mxu0 0.0
    %245 = vmatpush2.msra.mxu0 0.0
    %246 = vmatprep.subr.mxu0 0.0
    %247 = vmatpush2.msra.mxu0 0.0
    %248 = vmatprep.subr.mxu0 0.0
    %249 = vmatpush2.msra.mxu0 0.0
    %250 = vmatprep.subr.mxu0 0.0
    %251 = vmatpush2.msra.mxu0 0.0
    %252 = vmatprep.subr.mxu0 0.0
    %253 = vmatpush2.msra.mxu0 0.0
    %254 = vmatprep.subr.mxu0 0.0
    %255 = vmatpush2.msra.mxu0 0.0
    %256 = vmatprep.mubr.f32.mxu0 0.0
    %257 = vmatmul.mubr.f32.gmra.mxu0 %v187
    %v258 = vpop.f32.mrf.mxu0
    %v259 = vadd.f32 0.0, %v258
    %v260 = vpop.f32.mrf.mxu0
    %261 = vmatprep.mubr.f32.mxu0 0.0
    %262 = vmatmul.mubr.f32.gmra.mxu0 %v190
    %v263 = vpop.f32.mrf.mxu0
    %v264 = vadd.f32 0.0, %v263
    %v265 = vpop.f32.mrf.mxu0
    %266 = vdwg.mxu0
    %v268 = vlaneseq
    %v269 = vshrl.u32 %v268, 7
    %v270 = vsub.s32 0, %v269
    %v271 = vrot.slane %v94, %v270
    %v274 = vsel %vm104, %v259, 0
    %v277 = vsel %vm104, %v264, 0
    %279 = vmatprep.subr.mxu0 0.0
    %280 = vmatpush1.msra.mxu0 0.0
    %281 = vmatprep.subr.mxu0 0.0
    %282 = vmatpush1.msra.mxu0 0.0
    %283 = vmatprep.subr.mxu0 0.0
    %284 = vmatpush1.msra.mxu0 0.0
    %285 = vmatprep.subr.mxu0 0.0
    %286 = vmatpush1.msra.mxu0 0.0
    %287 = vmatprep.subr.mxu0 0.0
    %288 = vmatpush1.msra.mxu0 0.0
    %289 = vmatprep.subr.mxu0 0.0
    %290 = vmatpush1.msra.mxu0 0.0
    %291 = vmatprep.subr.mxu0 0.0
    %292 = vmatpush1.msra.mxu0 0.0
    %293 = vmatprep.subr.mxu0 0.0
    %294 = vmatpush1.msra.mxu0 0.0
    %295 = vmatprep.subr.mxu0 0.0
    %296 = vmatpush1.msra.mxu0 0.0
    %297 = vmatprep.subr.mxu0 0.0
    %298 = vmatpush1.msra.mxu0 0.0
    %299 = vmatprep.subr.mxu0 0.0
    %300 = vmatpush1.msra.mxu0 0.0
    %301 = vmatprep.subr.mxu0 0.0
    %302 = vmatpush1.msra.mxu0 0.0
    %303 = vmatprep.subr.mxu0 0.0
    %304 = vmatpush1.msra.mxu0 0.0
    %305 = vmatprep.subr.mxu0 0.0
    %306 = vmatpush1.msra.mxu0 0.0
    %307 = vmatprep.subr.mxu0 0.0
    %308 = vmatpush1.msra.mxu0 %v93
    %309 = vmatprep.subr.mxu0 0.0
    %310 = vmatpush1.msra.mxu0 %v92
    %311 = vmatprep.subr.mxu0 0.0
    %312 = vmatpush2.msra.mxu0 0.0
    %313 = vmatprep.subr.mxu0 0.0
    %314 = vmatpush2.msra.mxu0 0.0
    %315 = vmatprep.subr.mxu0 0.0
    %316 = vmatpush2.msra.mxu0 0.0
    %317 = vmatprep.subr.mxu0 0.0
    %318 = vmatpush2.msra.mxu0 0.0
    %319 = vmatprep.subr.mxu0 0.0
    %320 = vmatpush2.msra.mxu0 0.0
    %321 = vmatprep.subr.mxu0 0.0
    %322 = vmatpush2.msra.mxu0 0.0
    %323 = vmatprep.subr.mxu0 0.0
    %324 = vmatpush2.msra.mxu0 0.0
    %325 = vmatprep.subr.mxu0 0.0
    %326 = vmatpush2.msra.mxu0 0.0
    %327 = vmatprep.subr.mxu0 0.0
    %328 = vmatpush2.msra.mxu0 0.0
    %329 = vmatprep.subr.mxu0 0.0
    %330 = vmatpush2.msra.mxu0 0.0
    %331 = vmatprep.subr.mxu0 0.0
    %332 = vmatpush2.msra.mxu0 0.0
    %333 = vmatprep.subr.mxu0 0.0
    %334 = vmatpush2.msra.mxu0 0.0
    %335 = vmatprep.subr.mxu0 0.0
    %336 = vmatpush2.msra.mxu0 0.0
    %337 = vmatprep.subr.mxu0 0.0
    %338 = vmatpush2.msra.mxu0 0.0
    %339 = vmatprep.subr.mxu0 0.0
    %340 = vmatpush2.msra.mxu0 0.0
    %341 = vmatprep.subr.mxu0 0.0
    %342 = vmatpush2.msra.mxu0 0.0
    %343 = vmatprep.mubr.f32.mxu0 0.0
    %344 = vmatmul.mubr.f32.gmra.mxu0 %v274
    %v345 = vpop.f32.mrf.mxu0
    %v346 = vadd.f32 %v271, %v345
    %v347 = vpop.f32.mrf.mxu0
    %348 = vmatprep.mubr.f32.mxu0 0.0
    %349 = vmatmul.mubr.f32.gmra.mxu0 %v277
    %v350 = vpop.f32.mrf.mxu0
    %v351 = vadd.f32 %v271, %v350
    %v352 = vpop.f32.mrf.mxu0
    %353 = vdwg.mxu0
    %v354 = vadd.f32 %v346, %v178
    %v355 = vadd.f32 %v351, %v183
    %vm356 = vcmp.ge.f32.partialorder %v354, 0.0
    %vm357 = vcmp.ge.f32.partialorder %v355, 0.0
    %v358 = vmul.f32 %v354, 0.2
    %v359 = vmul.f32 %v355, 0.2
    %v360 = vsel %vm356, %v354, %v358
    %v361 = vsel %vm357, %v355, %v359
    %v362 = vld [vmem:[%s6] sm:$0xff]
    %v363 = vld [vmem:[%s6 + $0x8] sm:$0xff]
    %v364 = vld [vmem:[%s6 + $0x10] sm:$0xff]
    %v365 = vld [vmem:[%s6 + $0x18] sm:$0xff]
    %v366 = vld [vmem:[%s7] sm:$0x1]
    %v367 = vld [vmem:[%s8] sm:$0xff]
    %v368 = vld [vmem:[%s8 + $0x8] sm:$0xff]
    %v369 = vld [vmem:[%s8 + $0x10] sm:$0xff]
    %v370 = vld [vmem:[%s8 + $0x18] sm:$0xff]
    %v371 = vld [vmem:[%s9] sm:$0x1]
    %v373 = vlaneseq
    %v374 = vshrl.u32 %v373, 7
    %v375 = vsub.s32 0, %v374
    %v376 = vrot.slane %v371, %v375
    %vm378 = vcmask 261120
    %v380 = vsel %vm378, %v360, 0
    %v383 = vsel %vm378, %v361, 0
    %385 = vmatprep.subr.mxu0 0.0
    %386 = vmatpush1.msra.mxu0 0.0
    %387 = vmatprep.subr.mxu0 0.0
    %388 = vmatpush1.msra.mxu0 0.0
    %389 = vmatprep.subr.mxu0 0.0
    %390 = vmatpush1.msra.mxu0 0.0
    %391 = vmatprep.subr.mxu0 0.0
    %392 = vmatpush1.msra.mxu0 0.0
    %393 = vmatprep.subr.mxu0 0.0
    %394 = vmatpush1.msra.mxu0 0.0
    %395 = vmatprep.subr.mxu0 0.0
    %396 = vmatpush1.msra.mxu0 0.0
    %397 = vmatprep.subr.mxu0 0.0
    %398 = vmatpush1.msra.mxu0 0.0
    %399 = vmatprep.subr.mxu0 0.0
    %400 = vmatpush1.msra.mxu0 0.0
    %401 = vmatprep.subr.mxu0 0.0
    %402 = vmatpush1.msra.mxu0 0.0
    %403 = vmatprep.subr.mxu0 0.0
    %404 = vmatpush1.msra.mxu0 0.0
    %405 = vmatprep.subr.mxu0 0.0
    %406 = vmatpush1.msra.mxu0 0.0
    %407 = vmatprep.subr.mxu0 0.0
    %408 = vmatpush1.msra.mxu0 0.0
    %409 = vmatprep.subr.mxu0 0.0
    %410 = vmatpush1.msra.mxu0 %v370
    %411 = vmatprep.subr.mxu0 0.0
    %412 = vmatpush1.msra.mxu0 %v369
    %413 = vmatprep.subr.mxu0 0.0
    %414 = vmatpush1.msra.mxu0 %v368
    %415 = vmatprep.subr.mxu0 0.0
    %416 = vmatpush1.msra.mxu0 %v367
    %417 = vmatprep.subr.mxu0 0.0
    %418 = vmatpush2.msra.mxu0 0.0
    %419 = vmatprep.subr.mxu0 0.0
    %420 = vmatpush2.msra.mxu0 0.0
    %421 = vmatprep.subr.mxu0 0.0
    %422 = vmatpush2.msra.mxu0 0.0
    %423 = vmatprep.subr.mxu0 0.0
    %424 = vmatpush2.msra.mxu0 0.0
    %425 = vmatprep.subr.mxu0 0.0
    %426 = vmatpush2.msra.mxu0 0.0
    %427 = vmatprep.subr.mxu0 0.0
    %428 = vmatpush2.msra.mxu0 0.0
    %429 = vmatprep.subr.mxu0 0.0
    %430 = vmatpush2.msra.mxu0 0.0
    %431 = vmatprep.subr.mxu0 0.0
    %432 = vmatpush2.msra.mxu0 0.0
    %433 = vmatprep.subr.mxu0 0.0
    %434 = vmatpush2.msra.mxu0 0.0
    %435 = vmatprep.subr.mxu0 0.0
    %436 = vmatpush2.msra.mxu0 0.0
    %437 = vmatprep.subr.mxu0 0.0
    %438 = vmatpush2.msra.mxu0 0.0
    %439 = vmatprep.subr.mxu0 0.0
    %440 = vmatpush2.msra.mxu0 0.0
    %441 = vmatprep.subr.mxu0 0.0
    %442 = vmatpush2.msra.mxu0 0.0
    %443 = vmatprep.subr.mxu0 0.0
    %444 = vmatpush2.msra.mxu0 0.0
    %445 = vmatprep.subr.mxu0 0.0
    %446 = vmatpush2.msra.mxu0 0.0
    %447 = vmatprep.subr.mxu0 0.0
    %448 = vmatpush2.msra.mxu0 0.0
    %449 = vmatprep.mubr.f32.mxu0 0.0
    %450 = vmatmul.mubr.f32.gmra.mxu0 %v380
    %v451 = vpop.f32.mrf.mxu0
    %v452 = vadd.f32 %v376, %v451
    %v453 = vpop.f32.mrf.mxu0
    %454 = vmatprep.mubr.f32.mxu0 0.0
    %455 = vmatmul.mubr.f32.gmra.mxu0 %v383
    %v456 = vpop.f32.mrf.mxu0
    %v457 = vadd.f32 %v376, %v456
    %v458 = vpop.f32.mrf.mxu0
    %459 = vdwg.mxu0
    %460 = vmatprep.subr.mxu0 0.0
    %461 = vmatpush1.msra.mxu0 0.0
    %462 = vmatprep.subr.mxu0 0.0
    %463 = vmatpush1.msra.mxu0 0.0
    %464 = vmatprep.subr.mxu0 0.0
    %465 = vmatpush1.msra.mxu0 0.0
    %466 = vmatprep.subr.mxu0 0.0
    %467 = vmatpush1.msra.mxu0 0.0
    %468 = vmatprep.subr.mxu0 0.0
    %469 = vmatpush1.msra.mxu0 0.0
    %470 = vmatprep.subr.mxu0 0.0
    %471 = vmatpush1.msra.mxu0 0.0
    %472 = vmatprep.subr.mxu0 0.0
    %473 = vmatpush1.msra.mxu0 0.0
    %474 = vmatprep.subr.mxu0 0.0
    %475 = vmatpush1.msra.mxu0 0.0
    %476 = vmatprep.subr.mxu0 0.0
    %477 = vmatpush1.msra.mxu0 0.0
    %478 = vmatprep.subr.mxu0 0.0
    %479 = vmatpush1.msra.mxu0 0.0
    %480 = vmatprep.subr.mxu0 0.0
    %481 = vmatpush1.msra.mxu0 0.0
    %482 = vmatprep.subr.mxu0 0.0
    %483 = vmatpush1.msra.mxu0 0.0
    %484 = vmatprep.subr.mxu0 0.0
    %485 = vmatpush1.msra.mxu0 0.0
    %486 = vmatprep.subr.mxu0 0.0
    %487 = vmatpush1.msra.mxu0 0.0
    %488 = vmatprep.subr.mxu0 0.0
    %489 = vmatpush1.msra.mxu0 %v361
    %490 = vmatprep.subr.mxu0 0.0
    %491 = vmatpush1.msra.mxu0 %v360
    %492 = vmatprep.subr.mxu0 0.0
    %493 = vmatpush2.msra.mxu0 0.0
    %494 = vmatprep.subr.mxu0 0.0
    %495 = vmatpush2.msra.mxu0 0.0
    %496 = vmatprep.subr.mxu0 0.0
    %497 = vmatpush2.msra.mxu0 0.0
    %498 = vmatprep.subr.mxu0 0.0
    %499 = vmatpush2.msra.mxu0 0.0
    %500 = vmatprep.subr.mxu0 0.0
    %501 = vmatpush2.msra.mxu0 0.0
    %502 = vmatprep.subr.mxu0 0.0
    %503 = vmatpush2.msra.mxu0 0.0
    %504 = vmatprep.subr.mxu0 0.0
    %505 = vmatpush2.msra.mxu0 0.0
    %506 = vmatprep.subr.mxu0 0.0
    %507 = vmatpush2.msra.mxu0 0.0
    %508 = vmatprep.subr.mxu0 0.0
    %509 = vmatpush2.msra.mxu0 0.0
    %510 = vmatprep.subr.mxu0 0.0
    %511 = vmatpush2.msra.mxu0 0.0
    %512 = vmatprep.subr.mxu0 0.0
    %513 = vmatpush2.msra.mxu0 0.0
    %514 = vmatprep.subr.mxu0 0.0
    %515 = vmatpush2.msra.mxu0 0.0
    %516 = vmatprep.subr.mxu0 0.0
    %517 = vmatpush2.msra.mxu0 0.0
    %518 = vmatprep.subr.mxu0 0.0
    %519 = vmatpush2.msra.mxu0 0.0
    %520 = vmatprep.subr.mxu0 0.0
    %521 = vmatpush2.msra.mxu0 0.0
    %522 = vmatprep.subr.mxu0 0.0
    %523 = vmatpush2.msra.mxu0 0.0
    %524 = vmatprep.mubr.f32.mxu0 0.0
    %525 = vmatmul.mubr.f32.gmra.mxu0 %v187
    %v526 = vpop.f32.mrf.mxu0
    %v527 = vadd.f32 0.0, %v526
    %v528 = vpop.f32.mrf.mxu0
    %529 = vmatprep.mubr.f32.mxu0 0.0
    %530 = vmatmul.mubr.f32.gmra.mxu0 %v190
    %v531 = vpop.f32.mrf.mxu0
    %v532 = vadd.f32 0.0, %v531
    %v533 = vpop.f32.mrf.mxu0
    %534 = vdwg.mxu0
    %v536 = vlaneseq
    %v537 = vshrl.u32 %v536, 7
    %v538 = vsub.s32 0, %v537
    %v539 = vrot.slane %v366, %v538
    %v542 = vsel %vm378, %v527, 0
    %v545 = vsel %vm378, %v532, 0
    %547 = vmatprep.subr.mxu0 0.0
    %548 = vmatpush1.msra.mxu0 0.0
    %549 = vmatprep.subr.mxu0 0.0
    %550 = vmatpush1.msra.mxu0 0.0
    %551 = vmatprep.subr.mxu0 0.0
    %552 = vmatpush1.msra.mxu0 0.0
    %553 = vmatprep.subr.mxu0 0.0
    %554 = vmatpush1.msra.mxu0 0.0
    %555 = vmatprep.subr.mxu0 0.0
    %556 = vmatpush1.msra.mxu0 0.0
    %557 = vmatprep.subr.mxu0 0.0
    %558 = vmatpush1.msra.mxu0 0.0
    %559 = vmatprep.subr.mxu0 0.0
    %560 = vmatpush1.msra.mxu0 0.0
    %561 = vmatprep.subr.mxu0 0.0
    %562 = vmatpush1.msra.mxu0 0.0
    %563 = vmatprep.subr.mxu0 0.0
    %564 = vmatpush1.msra.mxu0 0.0
    %565 = vmatprep.subr.mxu0 0.0
    %566 = vmatpush1.msra.mxu0 0.0
    %567 = vmatprep.subr.mxu0 0.0
    %568 = vmatpush1.msra.mxu0 0.0
    %569 = vmatprep.subr.mxu0 0.0
    %570 = vmatpush1.msra.mxu0 0.0
    %571 = vmatprep.subr.mxu0 0.0
    %572 = vmatpush1.msra.mxu0 %v365
    %573 = vmatprep.subr.mxu0 0.0
    %574 = vmatpush1.msra.mxu0 %v364
    %575 = vmatprep.subr.mxu0 0.0
    %576 = vmatpush1.msra.mxu0 %v363
    %577 = vmatprep.subr.mxu0 0.0
    %578 = vmatpush1.msra.mxu0 %v362
    %579 = vmatprep.subr.mxu0 0.0
    %580 = vmatpush2.msra.mxu0 0.0
    %581 = vmatprep.subr.mxu0 0.0
    %582 = vmatpush2.msra.mxu0 0.0
    %583 = vmatprep.subr.mxu0 0.0
    %584 = vmatpush2.msra.mxu0 0.0
    %585 = vmatprep.subr.mxu0 0.0
    %586 = vmatpush2.msra.mxu0 0.0
    %587 = vmatprep.subr.mxu0 0.0
    %588 = vmatpush2.msra.mxu0 0.0
    %589 = vmatprep.subr.mxu0 0.0
    %590 = vmatpush2.msra.mxu0 0.0
    %591 = vmatprep.subr.mxu0 0.0
    %592 = vmatpush2.msra.mxu0 0.0
    %593 = vmatprep.subr.mxu0 0.0
    %594 = vmatpush2.msra.mxu0 0.0
    %595 = vmatprep.subr.mxu0 0.0
    %596 = vmatpush2.msra.mxu0 0.0
    %597 = vmatprep.subr.mxu0 0.0
    %598 = vmatpush2.msra.mxu0 0.0
    %599 = vmatprep.subr.mxu0 0.0
    %600 = vmatpush2.msra.mxu0 0.0
    %601 = vmatprep.subr.mxu0 0.0
    %602 = vmatpush2.msra.mxu0 0.0
    %603 = vmatprep.subr.mxu0 0.0
    %604 = vmatpush2.msra.mxu0 0.0
    %605 = vmatprep.subr.mxu0 0.0
    %606 = vmatpush2.msra.mxu0 0.0
    %607 = vmatprep.subr.mxu0 0.0
    %608 = vmatpush2.msra.mxu0 0.0
    %609 = vmatprep.subr.mxu0 0.0
    %610 = vmatpush2.msra.mxu0 0.0
    %611 = vmatprep.mubr.f32.mxu0 0.0
    %612 = vmatmul.mubr.f32.gmra.mxu0 %v542
    %v613 = vpop.f32.mrf.mxu0
    %v614 = vadd.f32 %v539, %v613
    %v615 = vpop.f32.mrf.mxu0
    %616 = vmatprep.mubr.f32.mxu0 0.0
    %617 = vmatmul.mubr.f32.gmra.mxu0 %v545
    %v618 = vpop.f32.mrf.mxu0
    %v619 = vadd.f32 %v539, %v618
    %v620 = vpop.f32.mrf.mxu0
    %621 = vdwg.mxu0
    %v622 = vadd.f32 %v614, %v452
    %v623 = vadd.f32 %v619, %v457
    %vm624 = vcmp.ge.f32.partialorder %v622, 0.0
    %vm625 = vcmp.ge.f32.partialorder %v623, 0.0
    %v626 = vmul.f32 %v622, 0.2
    %v627 = vmul.f32 %v623, 0.2
    %v628 = vsel %vm624, %v622, %v626
    %v629 = vsel %vm625, %v623, %v627
    %v630 = vld [vmem:[%s10] sm:$0xff]
    %v631 = vld [vmem:[%s10 + $0x8] sm:$0xff]
    %v632 = vld [vmem:[%s10 + $0x10] sm:$0xff]
    %v633 = vld [vmem:[%s10 + $0x18] sm:$0xff]
    %v634 = vld [vmem:[%s11] sm:$0x1]
    %v635 = vld [vmem:[%s12] sm:$0xff]
    %v636 = vld [vmem:[%s12 + $0x8] sm:$0xff]
    %v637 = vld [vmem:[%s12 + $0x10] sm:$0xff]
    %v638 = vld [vmem:[%s12 + $0x18] sm:$0xff]
    %v639 = vld [vmem:[%s13] sm:$0x1]
    %v641 = vlaneseq
    %v642 = vshrl.u32 %v641, 7
    %v643 = vsub.s32 0, %v642
    %v644 = vrot.slane %v639, %v643
    %v647 = vsel %vm378, %v628, 0
    %v650 = vsel %vm378, %v629, 0
    %652 = vmatprep.subr.mxu0 0.0
    %653 = vmatpush1.msra.mxu0 0.0
    %654 = vmatprep.subr.mxu0 0.0
    %655 = vmatpush1.msra.mxu0 0.0
    %656 = vmatprep.subr.mxu0 0.0
    %657 = vmatpush1.msra.mxu0 0.0
    %658 = vmatprep.subr.mxu0 0.0
    %659 = vmatpush1.msra.mxu0 0.0
    %660 = vmatprep.subr.mxu0 0.0
    %661 = vmatpush1.msra.mxu0 0.0
    %662 = vmatprep.subr.mxu0 0.0
    %663 = vmatpush1.msra.mxu0 0.0
    %664 = vmatprep.subr.mxu0 0.0
    %665 = vmatpush1.msra.mxu0 0.0
    %666 = vmatprep.subr.mxu0 0.0
    %667 = vmatpush1.msra.mxu0 0.0
    %668 = vmatprep.subr.mxu0 0.0
    %669 = vmatpush1.msra.mxu0 0.0
    %670 = vmatprep.subr.mxu0 0.0
    %671 = vmatpush1.msra.mxu0 0.0
    %672 = vmatprep.subr.mxu0 0.0
    %673 = vmatpush1.msra.mxu0 0.0
    %674 = vmatprep.subr.mxu0 0.0
    %675 = vmatpush1.msra.mxu0 0.0
    %676 = vmatprep.subr.mxu0 0.0
    %677 = vmatpush1.msra.mxu0 %v638
    %678 = vmatprep.subr.mxu0 0.0
    %679 = vmatpush1.msra.mxu0 %v637
    %680 = vmatprep.subr.mxu0 0.0
    %681 = vmatpush1.msra.mxu0 %v636
    %682 = vmatprep.subr.mxu0 0.0
    %683 = vmatpush1.msra.mxu0 %v635
    %684 = vmatprep.subr.mxu0 0.0
    %685 = vmatpush2.msra.mxu0 0.0
    %686 = vmatprep.subr.mxu0 0.0
    %687 = vmatpush2.msra.mxu0 0.0
    %688 = vmatprep.subr.mxu0 0.0
    %689 = vmatpush2.msra.mxu0 0.0
    %690 = vmatprep.subr.mxu0 0.0
    %691 = vmatpush2.msra.mxu0 0.0
    %692 = vmatprep.subr.mxu0 0.0
    %693 = vmatpush2.msra.mxu0 0.0
    %694 = vmatprep.subr.mxu0 0.0
    %695 = vmatpush2.msra.mxu0 0.0
    %696 = vmatprep.subr.mxu0 0.0
    %697 = vmatpush2.msra.mxu0 0.0
    %698 = vmatprep.subr.mxu0 0.0
    %699 = vmatpush2.msra.mxu0 0.0
    %700 = vmatprep.subr.mxu0 0.0
    %701 = vmatpush2.msra.mxu0 0.0
    %702 = vmatprep.subr.mxu0 0.0
    %703 = vmatpush2.msra.mxu0 0.0
    %704 = vmatprep.subr.mxu0 0.0
    %705 = vmatpush2.msra.mxu0 0.0
    %706 = vmatprep.subr.mxu0 0.0
    %707 = vmatpush2.msra.mxu0 0.0
    %708 = vmatprep.subr.mxu0 0.0
    %709 = vmatpush2.msra.mxu0 0.0
    %710 = vmatprep.subr.mxu0 0.0
    %711 = vmatpush2.msra.mxu0 0.0
    %712 = vmatprep.subr.mxu0 0.0
    %713 = vmatpush2.msra.mxu0 0.0
    %714 = vmatprep.subr.mxu0 0.0
    %715 = vmatpush2.msra.mxu0 0.0
    %716 = vmatprep.mubr.f32.mxu0 0.0
    %717 = vmatmul.mubr.f32.gmra.mxu0 %v647
    %v718 = vpop.f32.mrf.mxu0
    %v719 = vadd.f32 %v644, %v718
    %v720 = vpop.f32.mrf.mxu0
    %721 = vmatprep.mubr.f32.mxu0 0.0
    %722 = vmatmul.mubr.f32.gmra.mxu0 %v650
    %v723 = vpop.f32.mrf.mxu0
    %v724 = vadd.f32 %v644, %v723
    %v725 = vpop.f32.mrf.mxu0
    %726 = vdwg.mxu0
    %727 = vmatprep.subr.mxu0 0.0
    %728 = vmatpush1.msra.mxu0 0.0
    %729 = vmatprep.subr.mxu0 0.0
    %730 = vmatpush1.msra.mxu0 0.0
    %731 = vmatprep.subr.mxu0 0.0
    %732 = vmatpush1.msra.mxu0 0.0
    %733 = vmatprep.subr.mxu0 0.0
    %734 = vmatpush1.msra.mxu0 0.0
    %735 = vmatprep.subr.mxu0 0.0
    %736 = vmatpush1.msra.mxu0 0.0
    %737 = vmatprep.subr.mxu0 0.0
    %738 = vmatpush1.msra.mxu0 0.0
    %739 = vmatprep.subr.mxu0 0.0
    %740 = vmatpush1.msra.mxu0 0.0
    %741 = vmatprep.subr.mxu0 0.0
    %742 = vmatpush1.msra.mxu0 0.0
    %743 = vmatprep.subr.mxu0 0.0
    %744 = vmatpush1.msra.mxu0 0.0
    %745 = vmatprep.subr.mxu0 0.0
    %746 = vmatpush1.msra.mxu0 0.0
    %747 = vmatprep.subr.mxu0 0.0
    %748 = vmatpush1.msra.mxu0 0.0
    %749 = vmatprep.subr.mxu0 0.0
    %750 = vmatpush1.msra.mxu0 0.0
    %751 = vmatprep.subr.mxu0 0.0
    %752 = vmatpush1.msra.mxu0 %v633
    %753 = vmatprep.subr.mxu0 0.0
    %754 = vmatpush1.msra.mxu0 %v632
    %755 = vmatprep.subr.mxu0 0.0
    %756 = vmatpush1.msra.mxu0 %v631
    %757 = vmatprep.subr.mxu0 0.0
    %758 = vmatpush1.msra.mxu0 %v630
    %759 = vmatprep.subr.mxu0 0.0
    %760 = vmatpush2.msra.mxu0 0.0
    %761 = vmatprep.subr.mxu0 0.0
    %762 = vmatpush2.msra.mxu0 0.0
    %763 = vmatprep.subr.mxu0 0.0
    %764 = vmatpush2.msra.mxu0 0.0
    %765 = vmatprep.subr.mxu0 0.0
    %766 = vmatpush2.msra.mxu0 0.0
    %767 = vmatprep.subr.mxu0 0.0
    %768 = vmatpush2.msra.mxu0 0.0
    %769 = vmatprep.subr.mxu0 0.0
    %770 = vmatpush2.msra.mxu0 0.0
    %771 = vmatprep.subr.mxu0 0.0
    %772 = vmatpush2.msra.mxu0 0.0
    %773 = vmatprep.subr.mxu0 0.0
    %774 = vmatpush2.msra.mxu0 0.0
    %775 = vmatprep.subr.mxu0 0.0
    %776 = vmatpush2.msra.mxu0 0.0
    %777 = vmatprep.subr.mxu0 0.0
    %778 = vmatpush2.msra.mxu0 0.0
    %779 = vmatprep.subr.mxu0 0.0
    %780 = vmatpush2.msra.mxu0 0.0
    %781 = vmatprep.subr.mxu0 0.0
    %782 = vmatpush2.msra.mxu0 0.0
    %783 = vmatprep.subr.mxu0 0.0
    %784 = vmatpush2.msra.mxu0 0.0
    %785 = vmatprep.subr.mxu0 0.0
    %786 = vmatpush2.msra.mxu0 0.0
    %787 = vmatprep.subr.mxu0 0.0
    %788 = vmatpush2.msra.mxu0 0.0
    %789 = vmatprep.subr.mxu0 0.0
    %790 = vmatpush2.msra.mxu0 0.0
    %791 = vmatprep.mubr.f32.mxu0 0.0
    %792 = vmatmul.mubr.f32.gmra.mxu0 %v647
    %v793 = vpop.f32.mrf.mxu0
    %v794 = vadd.f32 0.0, %v793
    %v795 = vpop.f32.mrf.mxu0
    %796 = vmatprep.mubr.f32.mxu0 0.0
    %797 = vmatmul.mubr.f32.gmra.mxu0 %v650
    %v798 = vpop.f32.mrf.mxu0
    %v799 = vadd.f32 0.0, %v798
    %v800 = vpop.f32.mrf.mxu0
    %801 = vdwg.mxu0
    %v803 = vlaneseq
    %v804 = vshrl.u32 %v803, 7
    %v805 = vsub.s32 0, %v804
    %v806 = vrot.slane %v634, %v805
    %808 = vmatprep.subr.mxu0 0.0
    %809 = vmatpush1.msra.mxu0 0.0
    %810 = vmatprep.subr.mxu0 0.0
    %811 = vmatpush1.msra.mxu0 0.0
    %812 = vmatprep.subr.mxu0 0.0
    %813 = vmatpush1.msra.mxu0 0.0
    %814 = vmatprep.subr.mxu0 0.0
    %815 = vmatpush1.msra.mxu0 0.0
    %816 = vmatprep.subr.mxu0 0.0
    %817 = vmatpush1.msra.mxu0 0.0
    %818 = vmatprep.subr.mxu0 0.0
    %819 = vmatpush1.msra.mxu0 0.0
    %820 = vmatprep.subr.mxu0 0.0
    %821 = vmatpush1.msra.mxu0 0.0
    %822 = vmatprep.subr.mxu0 0.0
    %823 = vmatpush1.msra.mxu0 0.0
    %824 = vmatprep.subr.mxu0 0.0
    %825 = vmatpush1.msra.mxu0 0.0
    %826 = vmatprep.subr.mxu0 0.0
    %827 = vmatpush1.msra.mxu0 0.0
    %828 = vmatprep.subr.mxu0 0.0
    %829 = vmatpush1.msra.mxu0 0.0
    %830 = vmatprep.subr.mxu0 0.0
    %831 = vmatpush1.msra.mxu0 0.0
    %832 = vmatprep.subr.mxu0 0.0
    %833 = vmatpush1.msra.mxu0 0.0
    %834 = vmatprep.subr.mxu0 0.0
    %835 = vmatpush1.msra.mxu0 0.0
    %836 = vmatprep.subr.mxu0 0.0
    %837 = vmatpush1.msra.mxu0 %v799
    %838 = vmatprep.subr.mxu0 0.0
    %839 = vmatpush1.msra.mxu0 %v794
    %840 = vmatprep.subr.mxu0 0.0
    %841 = vmatpush2.msra.mxu0 0.0
    %842 = vmatprep.subr.mxu0 0.0
    %843 = vmatpush2.msra.mxu0 0.0
    %844 = vmatprep.subr.mxu0 0.0
    %845 = vmatpush2.msra.mxu0 0.0
    %846 = vmatprep.subr.mxu0 0.0
    %847 = vmatpush2.msra.mxu0 0.0
    %848 = vmatprep.subr.mxu0 0.0
    %849 = vmatpush2.msra.mxu0 0.0
    %850 = vmatprep.subr.mxu0 0.0
    %851 = vmatpush2.msra.mxu0 0.0
    %852 = vmatprep.subr.mxu0 0.0
    %853 = vmatpush2.msra.mxu0 0.0
    %854 = vmatprep.subr.mxu0 0.0
    %855 = vmatpush2.msra.mxu0 0.0
    %856 = vmatprep.subr.mxu0 0.0
    %857 = vmatpush2.msra.mxu0 0.0
    %858 = vmatprep.subr.mxu0 0.0
    %859 = vmatpush2.msra.mxu0 0.0
    %860 = vmatprep.subr.mxu0 0.0
    %861 = vmatpush2.msra.mxu0 0.0
    %862 = vmatprep.subr.mxu0 0.0
    %863 = vmatpush2.msra.mxu0 0.0
    %864 = vmatprep.subr.mxu0 0.0
    %865 = vmatpush2.msra.mxu0 0.0
    %866 = vmatprep.subr.mxu0 0.0
    %867 = vmatpush2.msra.mxu0 0.0
    %868 = vmatprep.subr.mxu0 0.0
    %869 = vmatpush2.msra.mxu0 0.0
    %870 = vmatprep.subr.mxu0 0.0
    %871 = vmatpush2.msra.mxu0 0.0
    %872 = vmatprep.mubr.f32.mxu0 0.0
    %873 = vmatmul.mubr.f32.gmra.mxu0 %v187
    %v874 = vpop.f32.mrf.mxu0
    %v875 = vadd.f32 %v806, %v874
    %v876 = vpop.f32.mrf.mxu0
    %877 = vmatprep.mubr.f32.mxu0 0.0
    %878 = vmatmul.mubr.f32.gmra.mxu0 %v190
    %v879 = vpop.f32.mrf.mxu0
    %v880 = vadd.f32 %v806, %v879
    %v881 = vpop.f32.mrf.mxu0
    %882 = vdwg.mxu0
    %v883 = vadd.f32 %v875, %v719
    %v884 = vadd.f32 %v880, %v724
    %vm885 = vcmp.ge.f32.partialorder %v883, 0.0
    %vm886 = vcmp.ge.f32.partialorder %v884, 0.0
    %v887 = vmul.f32 %v883, 0.2
    %v888 = vmul.f32 %v884, 0.2
    %v889 = vsel %vm885, %v883, %v887
    %v890 = vsel %vm886, %v884, %v888
    %s891 = scalar_lea.vmem %s1, 16
    %v892 = vld [vmem:[%s891] sm:$0xff]
    %v893 = vld [vmem:[%s891 + $0x8] sm:$0xff]
    %s894 = scalar_lea.vmem [#allocation4], 16
    %v895 = vld [vmem:[%s894] sm:$0xff]
    %v896 = vld [vmem:[%s894 + $0x8] sm:$0xff]
    %s897 = scalar_lea.vmem %s3, 1
    %v898 = vld [vmem:[%s897] sm:$0x1]
    %s899 = scalar_lea.vmem [#allocation6], 16
    %v900 = vld [vmem:[%s899] sm:$0xff]
    %v901 = vld [vmem:[%s899 + $0x8] sm:$0xff]
    %s902 = scalar_lea.vmem %s5, 1
    %v903 = vld [vmem:[%s902] sm:$0x1]
    %v905 = vlaneseq
    %v906 = vshrl.u32 %v905, 7
    %v907 = vsub.s32 0, %v906
    %v908 = vrot.slane %v903, %v907
    %910 = vmatprep.subr.mxu0 0.0
    %911 = vmatpush1.msra.mxu0 0.0
    %912 = vmatprep.subr.mxu0 0.0
    %913 = vmatpush1.msra.mxu0 0.0
    %914 = vmatprep.subr.mxu0 0.0
    %915 = vmatpush1.msra.mxu0 0.0
    %916 = vmatprep.subr.mxu0 0.0
    %917 = vmatpush1.msra.mxu0 0.0
    %918 = vmatprep.subr.mxu0 0.0
    %919 = vmatpush1.msra.mxu0 0.0
    %920 = vmatprep.subr.mxu0 0.0
    %921 = vmatpush1.msra.mxu0 0.0
    %922 = vmatprep.subr.mxu0 0.0
    %923 = vmatpush1.msra.mxu0 0.0
    %924 = vmatprep.subr.mxu0 0.0
    %925 = vmatpush1.msra.mxu0 0.0
    %926 = vmatprep.subr.mxu0 0.0
    %927 = vmatpush1.msra.mxu0 0.0
    %928 = vmatprep.subr.mxu0 0.0
    %929 = vmatpush1.msra.mxu0 0.0
    %930 = vmatprep.subr.mxu0 0.0
    %931 = vmatpush1.msra.mxu0 0.0
    %932 = vmatprep.subr.mxu0 0.0
    %933 = vmatpush1.msra.mxu0 0.0
    %934 = vmatprep.subr.mxu0 0.0
    %935 = vmatpush1.msra.mxu0 0.0
    %936 = vmatprep.subr.mxu0 0.0
    %937 = vmatpush1.msra.mxu0 0.0
    %938 = vmatprep.subr.mxu0 0.0
    %939 = vmatpush1.msra.mxu0 %v901
    %940 = vmatprep.subr.mxu0 0.0
    %941 = vmatpush1.msra.mxu0 %v900
    %942 = vmatprep.subr.mxu0 0.0
    %943 = vmatpush2.msra.mxu0 0.0
    %944 = vmatprep.subr.mxu0 0.0
    %945 = vmatpush2.msra.mxu0 0.0
    %946 = vmatprep.subr.mxu0 0.0
    %947 = vmatpush2.msra.mxu0 0.0
    %948 = vmatprep.subr.mxu0 0.0
    %949 = vmatpush2.msra.mxu0 0.0
    %950 = vmatprep.subr.mxu0 0.0
    %951 = vmatpush2.msra.mxu0 0.0
    %952 = vmatprep.subr.mxu0 0.0
    %953 = vmatpush2.msra.mxu0 0.0
    %954 = vmatprep.subr.mxu0 0.0
    %955 = vmatpush2.msra.mxu0 0.0
    %956 = vmatprep.subr.mxu0 0.0
    %957 = vmatpush2.msra.mxu0 0.0
    %958 = vmatprep.subr.mxu0 0.0
    %959 = vmatpush2.msra.mxu0 0.0
    %960 = vmatprep.subr.mxu0 0.0
    %961 = vmatpush2.msra.mxu0 0.0
    %962 = vmatprep.subr.mxu0 0.0
    %963 = vmatpush2.msra.mxu0 0.0
    %964 = vmatprep.subr.mxu0 0.0
    %965 = vmatpush2.msra.mxu0 0.0
    %966 = vmatprep.subr.mxu0 0.0
    %967 = vmatpush2.msra.mxu0 0.0
    %968 = vmatprep.subr.mxu0 0.0
    %969 = vmatpush2.msra.mxu0 0.0
    %970 = vmatprep.subr.mxu0 0.0
    %971 = vmatpush2.msra.mxu0 0.0
    %972 = vmatprep.subr.mxu0 0.0
    %973 = vmatpush2.msra.mxu0 0.0
    %974 = vmatprep.mubr.f32.mxu0 0.0
    %975 = vmatmul.mubr.f32.gmra.mxu0 %v106
    %v976 = vpop.f32.mrf.mxu0
    %v977 = vadd.f32 %v908, %v976
    %v978 = vpop.f32.mrf.mxu0
    %979 = vmatprep.mubr.f32.mxu0 0.0
    %980 = vmatmul.mubr.f32.gmra.mxu0 %v109
    %v981 = vpop.f32.mrf.mxu0
    %v982 = vadd.f32 %v908, %v981
    %v983 = vpop.f32.mrf.mxu0
    %984 = vdwg.mxu0
    %v986 = vsel %vm104, %v892, 0
    %v989 = vsel %vm104, %v893, 0
    %991 = vmatprep.subr.mxu0 0.0
    %992 = vmatpush1.msra.mxu0 0.0
    %993 = vmatprep.subr.mxu0 0.0
    %994 = vmatpush1.msra.mxu0 0.0
    %995 = vmatprep.subr.mxu0 0.0
    %996 = vmatpush1.msra.mxu0 0.0
    %997 = vmatprep.subr.mxu0 0.0
    %998 = vmatpush1.msra.mxu0 0.0
    %999 = vmatprep.subr.mxu0 0.0
    %1000 = vmatpush1.msra.mxu0 0.0
    %1001 = vmatprep.subr.mxu0 0.0
    %1002 = vmatpush1.msra.mxu0 0.0
    %1003 = vmatprep.subr.mxu0 0.0
    %1004 = vmatpush1.msra.mxu0 0.0
    %1005 = vmatprep.subr.mxu0 0.0
    %1006 = vmatpush1.msra.mxu0 0.0
    %1007 = vmatprep.subr.mxu0 0.0
    %1008 = vmatpush1.msra.mxu0 0.0
    %1009 = vmatprep.subr.mxu0 0.0
    %1010 = vmatpush1.msra.mxu0 0.0
    %1011 = vmatprep.subr.mxu0 0.0
    %1012 = vmatpush1.msra.mxu0 0.0
    %1013 = vmatprep.subr.mxu0 0.0
    %1014 = vmatpush1.msra.mxu0 0.0
    %1015 = vmatprep.subr.mxu0 0.0
    %1016 = vmatpush1.msra.mxu0 0.0
    %1017 = vmatprep.subr.mxu0 0.0
    %1018 = vmatpush1.msra.mxu0 0.0
    %1019 = vmatprep.subr.mxu0 0.0
    %1020 = vmatpush1.msra.mxu0 %v89
    %1021 = vmatprep.subr.mxu0 0.0
    %1022 = vmatpush1.msra.mxu0 %v88
    %1023 = vmatprep.subr.mxu0 0.0
    %1024 = vmatpush2.msra.mxu0 0.0
    %1025 = vmatprep.subr.mxu0 0.0
    %1026 = vmatpush2.msra.mxu0 0.0
    %1027 = vmatprep.subr.mxu0 0.0
    %1028 = vmatpush2.msra.mxu0 0.0
    %1029 = vmatprep.subr.mxu0 0.0
    %1030 = vmatpush2.msra.mxu0 0.0
    %1031 = vmatprep.subr.mxu0 0.0
    %1032 = vmatpush2.msra.mxu0 0.0
    %1033 = vmatprep.subr.mxu0 0.0
    %1034 = vmatpush2.msra.mxu0 0.0
    %1035 = vmatprep.subr.mxu0 0.0
    %1036 = vmatpush2.msra.mxu0 0.0
    %1037 = vmatprep.subr.mxu0 0.0
    %1038 = vmatpush2.msra.mxu0 0.0
    %1039 = vmatprep.subr.mxu0 0.0
    %1040 = vmatpush2.msra.mxu0 0.0
    %1041 = vmatprep.subr.mxu0 0.0
    %1042 = vmatpush2.msra.mxu0 0.0
    %1043 = vmatprep.subr.mxu0 0.0
    %1044 = vmatpush2.msra.mxu0 0.0
    %1045 = vmatprep.subr.mxu0 0.0
    %1046 = vmatpush2.msra.mxu0 0.0
    %1047 = vmatprep.subr.mxu0 0.0
    %1048 = vmatpush2.msra.mxu0 0.0
    %1049 = vmatprep.subr.mxu0 0.0
    %1050 = vmatpush2.msra.mxu0 0.0
    %1051 = vmatprep.subr.mxu0 0.0
    %1052 = vmatpush2.msra.mxu0 0.0
    %1053 = vmatprep.subr.mxu0 0.0
    %1054 = vmatpush2.msra.mxu0 0.0
    %1055 = vmatprep.mubr.f32.mxu0 0.0
    %1056 = vmatmul.mubr.f32.gmra.mxu0 %v986
    %v1057 = vpop.f32.mrf.mxu0
    %v1058 = vadd.f32 0.0, %v1057
    %v1059 = vpop.f32.mrf.mxu0
    %1060 = vmatprep.mubr.f32.mxu0 0.0
    %1061 = vmatmul.mubr.f32.gmra.mxu0 %v989
    %v1062 = vpop.f32.mrf.mxu0
    %v1063 = vadd.f32 0.0, %v1062
    %v1064 = vpop.f32.mrf.mxu0
    %1065 = vdwg.mxu0
    %v1067 = vlaneseq
    %v1068 = vshrl.u32 %v1067, 7
    %v1069 = vsub.s32 0, %v1068
    %v1070 = vrot.slane %v898, %v1069
    %v1073 = vsel %vm104, %v1058, 0
    %v1076 = vsel %vm104, %v1063, 0
    %1078 = vmatprep.subr.mxu0 0.0
    %1079 = vmatpush1.msra.mxu0 0.0
    %1080 = vmatprep.subr.mxu0 0.0
    %1081 = vmatpush1.msra.mxu0 0.0
    %1082 = vmatprep.subr.mxu0 0.0
    %1083 = vmatpush1.msra.mxu0 0.0
    %1084 = vmatprep.subr.mxu0 0.0
    %1085 = vmatpush1.msra.mxu0 0.0
    %1086 = vmatprep.subr.mxu0 0.0
    %1087 = vmatpush1.msra.mxu0 0.0
    %1088 = vmatprep.subr.mxu0 0.0
    %1089 = vmatpush1.msra.mxu0 0.0
    %1090 = vmatprep.subr.mxu0 0.0
    %1091 = vmatpush1.msra.mxu0 0.0
    %1092 = vmatprep.subr.mxu0 0.0
    %1093 = vmatpush1.msra.mxu0 0.0
    %1094 = vmatprep.subr.mxu0 0.0
    %1095 = vmatpush1.msra.mxu0 0.0
    %1096 = vmatprep.subr.mxu0 0.0
    %1097 = vmatpush1.msra.mxu0 0.0
    %1098 = vmatprep.subr.mxu0 0.0
    %1099 = vmatpush1.msra.mxu0 0.0
    %1100 = vmatprep.subr.mxu0 0.0
    %1101 = vmatpush1.msra.mxu0 0.0
    %1102 = vmatprep.subr.mxu0 0.0
    %1103 = vmatpush1.msra.mxu0 0.0
    %1104 = vmatprep.subr.mxu0 0.0
    %1105 = vmatpush1.msra.mxu0 0.0
    %1106 = vmatprep.subr.mxu0 0.0
    %1107 = vmatpush1.msra.mxu0 %v896
    %1108 = vmatprep.subr.mxu0 0.0
    %1109 = vmatpush1.msra.mxu0 %v895
    %1110 = vmatprep.subr.mxu0 0.0
    %1111 = vmatpush2.msra.mxu0 0.0
    %1112 = vmatprep.subr.mxu0 0.0
    %1113 = vmatpush2.msra.mxu0 0.0
    %1114 = vmatprep.subr.mxu0 0.0
    %1115 = vmatpush2.msra.mxu0 0.0
    %1116 = vmatprep.subr.mxu0 0.0
    %1117 = vmatpush2.msra.mxu0 0.0
    %1118 = vmatprep.subr.mxu0 0.0
    %1119 = vmatpush2.msra.mxu0 0.0
    %1120 = vmatprep.subr.mxu0 0.0
    %1121 = vmatpush2.msra.mxu0 0.0
    %1122 = vmatprep.subr.mxu0 0.0
    %1123 = vmatpush2.msra.mxu0 0.0
    %1124 = vmatprep.subr.mxu0 0.0
    %1125 = vmatpush2.msra.mxu0 0.0
    %1126 = vmatprep.subr.mxu0 0.0
    %1127 = vmatpush2.msra.mxu0 0.0
    %1128 = vmatprep.subr.mxu0 0.0
    %1129 = vmatpush2.msra.mxu0 0.0
    %1130 = vmatprep.subr.mxu0 0.0
    %1131 = vmatpush2.msra.mxu0 0.0
    %1132 = vmatprep.subr.mxu0 0.0
    %1133 = vmatpush2.msra.mxu0 0.0
    %1134 = vmatprep.subr.mxu0 0.0
    %1135 = vmatpush2.msra.mxu0 0.0
    %1136 = vmatprep.subr.mxu0 0.0
    %1137 = vmatpush2.msra.mxu0 0.0
    %1138 = vmatprep.subr.mxu0 0.0
    %1139 = vmatpush2.msra.mxu0 0.0
    %1140 = vmatprep.subr.mxu0 0.0
    %1141 = vmatpush2.msra.mxu0 0.0
    %1142 = vmatprep.mubr.f32.mxu0 0.0
    %1143 = vmatmul.mubr.f32.gmra.mxu0 %v1073
    %v1144 = vpop.f32.mrf.mxu0
    %v1145 = vadd.f32 %v1070, %v1144
    %v1146 = vpop.f32.mrf.mxu0
    %1147 = vmatprep.mubr.f32.mxu0 0.0
    %1148 = vmatmul.mubr.f32.gmra.mxu0 %v1076
    %v1149 = vpop.f32.mrf.mxu0
    %v1150 = vadd.f32 %v1070, %v1149
    %v1151 = vpop.f32.mrf.mxu0
    %1152 = vdwg.mxu0
    %v1153 = vadd.f32 %v1145, %v977
    %v1154 = vadd.f32 %v1150, %v982
    %vm1155 = vcmp.ge.f32.partialorder %v1153, 0.0
    %vm1156 = vcmp.ge.f32.partialorder %v1154, 0.0
    %v1157 = vmul.f32 %v1153, 0.2
    %v1158 = vmul.f32 %v1154, 0.2
    %v1159 = vsel %vm1155, %v1153, %v1157
    %v1160 = vsel %vm1156, %v1154, %v1158
    %s1161 = scalar_lea.vmem %s6, 32
    %v1162 = vld [vmem:[%s1161] sm:$0xff]
    %v1163 = vld [vmem:[%s1161 + $0x8] sm:$0xff]
    %v1164 = vld [vmem:[%s1161 + $0x10] sm:$0xff]
    %v1165 = vld [vmem:[%s1161 + $0x18] sm:$0xff]
    %s1166 = scalar_lea.vmem %s7, 1
    %v1167 = vld [vmem:[%s1166] sm:$0x1]
    %s1168 = scalar_lea.vmem %s8, 32
    %v1169 = vld [vmem:[%s1168] sm:$0xff]
    %v1170 = vld [vmem:[%s1168 + $0x8] sm:$0xff]
    %v1171 = vld [vmem:[%s1168 + $0x10] sm:$0xff]
    %v1172 = vld [vmem:[%s1168 + $0x18] sm:$0xff]
    %s1173 = scalar_lea.vmem %s9, 1
    %v1174 = vld [vmem:[%s1173] sm:$0x1]
    %v1176 = vlaneseq
    %v1177 = vshrl.u32 %v1176, 7
    %v1178 = vsub.s32 0, %v1177
    %v1179 = vrot.slane %v1174, %v1178
    %v1182 = vsel %vm378, %v1159, 0
    %v1185 = vsel %vm378, %v1160, 0
    %1187 = vmatprep.subr.mxu0 0.0
    %1188 = vmatpush1.msra.mxu0 0.0
    %1189 = vmatprep.subr.mxu0 0.0
    %1190 = vmatpush1.msra.mxu0 0.0
    %1191 = vmatprep.subr.mxu0 0.0
    %1192 = vmatpush1.msra.mxu0 0.0
    %1193 = vmatprep.subr.mxu0 0.0
    %1194 = vmatpush1.msra.mxu0 0.0
    %1195 = vmatprep.subr.mxu0 0.0
    %1196 = vmatpush1.msra.mxu0 0.0
    %1197 = vmatprep.subr.mxu0 0.0
    %1198 = vmatpush1.msra.mxu0 0.0
    %1199 = vmatprep.subr.mxu0 0.0
    %1200 = vmatpush1.msra.mxu0 0.0
    %1201 = vmatprep.subr.mxu0 0.0
    %1202 = vmatpush1.msra.mxu0 0.0
    %1203 = vmatprep.subr.mxu0 0.0
    %1204 = vmatpush1.msra.mxu0 0.0
    %1205 = vmatprep.subr.mxu0 0.0
    %1206 = vmatpush1.msra.mxu0 0.0
    %1207 = vmatprep.subr.mxu0 0.0
    %1208 = vmatpush1.msra.mxu0 0.0
    %1209 = vmatprep.subr.mxu0 0.0
    %1210 = vmatpush1.msra.mxu0 0.0
    %1211 = vmatprep.subr.mxu0 0.0
    %1212 = vmatpush1.msra.mxu0 %v1172
    %1213 = vmatprep.subr.mxu0 0.0
    %1214 = vmatpush1.msra.mxu0 %v1171
    %1215 = vmatprep.subr.mxu0 0.0
    %1216 = vmatpush1.msra.mxu0 %v1170
    %1217 = vmatprep.subr.mxu0 0.0
    %1218 = vmatpush1.msra.mxu0 %v1169
    %1219 = vmatprep.subr.mxu0 0.0
    %1220 = vmatpush2.msra.mxu0 0.0
    %1221 = vmatprep.subr.mxu0 0.0
    %1222 = vmatpush2.msra.mxu0 0.0
    %1223 = vmatprep.subr.mxu0 0.0
    %1224 = vmatpush2.msra.mxu0 0.0
    %1225 = vmatprep.subr.mxu0 0.0
    %1226 = vmatpush2.msra.mxu0 0.0
    %1227 = vmatprep.subr.mxu0 0.0
    %1228 = vmatpush2.msra.mxu0 0.0
    %1229 = vmatprep.subr.mxu0 0.0
    %1230 = vmatpush2.msra.mxu0 0.0
    %1231 = vmatprep.subr.mxu0 0.0
    %1232 = vmatpush2.msra.mxu0 0.0
    %1233 = vmatprep.subr.mxu0 0.0
    %1234 = vmatpush2.msra.mxu0 0.0
    %1235 = vmatprep.subr.mxu0 0.0
    %1236 = vmatpush2.msra.mxu0 0.0
    %1237 = vmatprep.subr.mxu0 0.0
    %1238 = vmatpush2.msra.mxu0 0.0
    %1239 = vmatprep.subr.mxu0 0.0
    %1240 = vmatpush2.msra.mxu0 0.0
    %1241 = vmatprep.subr.mxu0 0.0
    %1242 = vmatpush2.msra.mxu0 0.0
    %1243 = vmatprep.subr.mxu0 0.0
    %1244 = vmatpush2.msra.mxu0 0.0
    %1245 = vmatprep.subr.mxu0 0.0
    %1246 = vmatpush2.msra.mxu0 0.0
    %1247 = vmatprep.subr.mxu0 0.0
    %1248 = vmatpush2.msra.mxu0 0.0
    %1249 = vmatprep.subr.mxu0 0.0
    %1250 = vmatpush2.msra.mxu0 0.0
    %1251 = vmatprep.mubr.f32.mxu0 0.0
    %1252 = vmatmul.mubr.f32.gmra.mxu0 %v1182
    %v1253 = vpop.f32.mrf.mxu0
    %v1254 = vadd.f32 %v1179, %v1253
    %v1255 = vpop.f32.mrf.mxu0
    %1256 = vmatprep.mubr.f32.mxu0 0.0
    %1257 = vmatmul.mubr.f32.gmra.mxu0 %v1185
    %v1258 = vpop.f32.mrf.mxu0
    %v1259 = vadd.f32 %v1179, %v1258
    %v1260 = vpop.f32.mrf.mxu0
    %1261 = vdwg.mxu0
    %1262 = vmatprep.subr.mxu0 0.0
    %1263 = vmatpush1.msra.mxu0 0.0
    %1264 = vmatprep.subr.mxu0 0.0
    %1265 = vmatpush1.msra.mxu0 0.0
    %1266 = vmatprep.subr.mxu0 0.0
    %1267 = vmatpush1.msra.mxu0 0.0
    %1268 = vmatprep.subr.mxu0 0.0
    %1269 = vmatpush1.msra.mxu0 0.0
    %1270 = vmatprep.subr.mxu0 0.0
    %1271 = vmatpush1.msra.mxu0 0.0
    %1272 = vmatprep.subr.mxu0 0.0
    %1273 = vmatpush1.msra.mxu0 0.0
    %1274 = vmatprep.subr.mxu0 0.0
    %1275 = vmatpush1.msra.mxu0 0.0
    %1276 = vmatprep.subr.mxu0 0.0
    %1277 = vmatpush1.msra.mxu0 0.0
    %1278 = vmatprep.subr.mxu0 0.0
    %1279 = vmatpush1.msra.mxu0 0.0
    %1280 = vmatprep.subr.mxu0 0.0
    %1281 = vmatpush1.msra.mxu0 0.0
    %1282 = vmatprep.subr.mxu0 0.0
    %1283 = vmatpush1.msra.mxu0 0.0
    %1284 = vmatprep.subr.mxu0 0.0
    %1285 = vmatpush1.msra.mxu0 0.0
    %1286 = vmatprep.subr.mxu0 0.0
    %1287 = vmatpush1.msra.mxu0 0.0
    %1288 = vmatprep.subr.mxu0 0.0
    %1289 = vmatpush1.msra.mxu0 0.0
    %1290 = vmatprep.subr.mxu0 0.0
    %1291 = vmatpush1.msra.mxu0 %v1160
    %1292 = vmatprep.subr.mxu0 0.0
    %1293 = vmatpush1.msra.mxu0 %v1159
    %1294 = vmatprep.subr.mxu0 0.0
    %1295 = vmatpush2.msra.mxu0 0.0
    %1296 = vmatprep.subr.mxu0 0.0
    %1297 = vmatpush2.msra.mxu0 0.0
    %1298 = vmatprep.subr.mxu0 0.0
    %1299 = vmatpush2.msra.mxu0 0.0
    %1300 = vmatprep.subr.mxu0 0.0
    %1301 = vmatpush2.msra.mxu0 0.0
    %1302 = vmatprep.subr.mxu0 0.0
    %1303 = vmatpush2.msra.mxu0 0.0
    %1304 = vmatprep.subr.mxu0 0.0
    %1305 = vmatpush2.msra.mxu0 0.0
    %1306 = vmatprep.subr.mxu0 0.0
    %1307 = vmatpush2.msra.mxu0 0.0
    %1308 = vmatprep.subr.mxu0 0.0
    %1309 = vmatpush2.msra.mxu0 0.0
    %1310 = vmatprep.subr.mxu0 0.0
    %1311 = vmatpush2.msra.mxu0 0.0
    %1312 = vmatprep.subr.mxu0 0.0
    %1313 = vmatpush2.msra.mxu0 0.0
    %1314 = vmatprep.subr.mxu0 0.0
    %1315 = vmatpush2.msra.mxu0 0.0
    %1316 = vmatprep.subr.mxu0 0.0
    %1317 = vmatpush2.msra.mxu0 0.0
    %1318 = vmatprep.subr.mxu0 0.0
    %1319 = vmatpush2.msra.mxu0 0.0
    %1320 = vmatprep.subr.mxu0 0.0
    %1321 = vmatpush2.msra.mxu0 0.0
    %1322 = vmatprep.subr.mxu0 0.0
    %1323 = vmatpush2.msra.mxu0 0.0
    %1324 = vmatprep.subr.mxu0 0.0
    %1325 = vmatpush2.msra.mxu0 0.0
    %1326 = vmatprep.mubr.f32.mxu0 0.0
    %1327 = vmatmul.mubr.f32.gmra.mxu0 %v986
    %v1328 = vpop.f32.mrf.mxu0
    %v1329 = vadd.f32 0.0, %v1328
    %v1330 = vpop.f32.mrf.mxu0
    %1331 = vmatprep.mubr.f32.mxu0 0.0
    %1332 = vmatmul.mubr.f32.gmra.mxu0 %v989
    %v1333 = vpop.f32.mrf.mxu0
    %v1334 = vadd.f32 0.0, %v1333
    %v1335 = vpop.f32.mrf.mxu0
    %1336 = vdwg.mxu0
    %v1338 = vlaneseq
    %v1339 = vshrl.u32 %v1338, 7
    %v1340 = vsub.s32 0, %v1339
    %v1341 = vrot.slane %v1167, %v1340
    %v1344 = vsel %vm378, %v1329, 0
    %v1347 = vsel %vm378, %v1334, 0
    %1349 = vmatprep.subr.mxu0 0.0
    %1350 = vmatpush1.msra.mxu0 0.0
    %1351 = vmatprep.subr.mxu0 0.0
    %1352 = vmatpush1.msra.mxu0 0.0
    %1353 = vmatprep.subr.mxu0 0.0
    %1354 = vmatpush1.msra.mxu0 0.0
    %1355 = vmatprep.subr.mxu0 0.0
    %1356 = vmatpush1.msra.mxu0 0.0
    %1357 = vmatprep.subr.mxu0 0.0
    %1358 = vmatpush1.msra.mxu0 0.0
    %1359 = vmatprep.subr.mxu0 0.0
    %1360 = vmatpush1.msra.mxu0 0.0
    %1361 = vmatprep.subr.mxu0 0.0
    %1362 = vmatpush1.msra.mxu0 0.0
    %1363 = vmatprep.subr.mxu0 0.0
    %1364 = vmatpush1.msra.mxu0 0.0
    %1365 = vmatprep.subr.mxu0 0.0
    %1366 = vmatpush1.msra.mxu0 0.0
    %1367 = vmatprep.subr.mxu0 0.0
    %1368 = vmatpush1.msra.mxu0 0.0
    %1369 = vmatprep.subr.mxu0 0.0
    %1370 = vmatpush1.msra.mxu0 0.0
    %1371 = vmatprep.subr.mxu0 0.0
    %1372 = vmatpush1.msra.mxu0 0.0
    %1373 = vmatprep.subr.mxu0 0.0
    %1374 = vmatpush1.msra.mxu0 %v1165
    %1375 = vmatprep.subr.mxu0 0.0
    %1376 = vmatpush1.msra.mxu0 %v1164
    %1377 = vmatprep.subr.mxu0 0.0
    %1378 = vmatpush1.msra.mxu0 %v1163
    %1379 = vmatprep.subr.mxu0 0.0
    %1380 = vmatpush1.msra.mxu0 %v1162
    %1381 = vmatprep.subr.mxu0 0.0
    %1382 = vmatpush2.msra.mxu0 0.0
    %1383 = vmatprep.subr.mxu0 0.0
    %1384 = vmatpush2.msra.mxu0 0.0
    %1385 = vmatprep.subr.mxu0 0.0
    %1386 = vmatpush2.msra.mxu0 0.0
    %1387 = vmatprep.subr.mxu0 0.0
    %1388 = vmatpush2.msra.mxu0 0.0
    %1389 = vmatprep.subr.mxu0 0.0
    %1390 = vmatpush2.msra.mxu0 0.0
    %1391 = vmatprep.subr.mxu0 0.0
    %1392 = vmatpush2.msra.mxu0 0.0
    %1393 = vmatprep.subr.mxu0 0.0
    %1394 = vmatpush2.msra.mxu0 0.0
    %1395 = vmatprep.subr.mxu0 0.0
    %1396 = vmatpush2.msra.mxu0 0.0
    %1397 = vmatprep.subr.mxu0 0.0
    %1398 = vmatpush2.msra.mxu0 0.0
    %1399 = vmatprep.subr.mxu0 0.0
    %1400 = vmatpush2.msra.mxu0 0.0
    %1401 = vmatprep.subr.mxu0 0.0
    %1402 = vmatpush2.msra.mxu0 0.0
    %1403 = vmatprep.subr.mxu0 0.0
    %1404 = vmatpush2.msra.mxu0 0.0
    %1405 = vmatprep.subr.mxu0 0.0
    %1406 = vmatpush2.msra.mxu0 0.0
    %1407 = vmatprep.subr.mxu0 0.0
    %1408 = vmatpush2.msra.mxu0 0.0
    %1409 = vmatprep.subr.mxu0 0.0
    %1410 = vmatpush2.msra.mxu0 0.0
    %1411 = vmatprep.subr.mxu0 0.0
    %1412 = vmatpush2.msra.mxu0 0.0
    %1413 = vmatprep.mubr.f32.mxu0 0.0
    %1414 = vmatmul.mubr.f32.gmra.mxu0 %v1344
    %v1415 = vpop.f32.mrf.mxu0
    %v1416 = vadd.f32 %v1341, %v1415
    %v1417 = vpop.f32.mrf.mxu0
    %1418 = vmatprep.mubr.f32.mxu0 0.0
    %1419 = vmatmul.mubr.f32.gmra.mxu0 %v1347
    %v1420 = vpop.f32.mrf.mxu0
    %v1421 = vadd.f32 %v1341, %v1420
    %v1422 = vpop.f32.mrf.mxu0
    %1423 = vdwg.mxu0
    %v1424 = vadd.f32 %v1416, %v1254
    %v1425 = vadd.f32 %v1421, %v1259
    %vm1426 = vcmp.ge.f32.partialorder %v1424, 0.0
    %vm1427 = vcmp.ge.f32.partialorder %v1425, 0.0
    %v1428 = vmul.f32 %v1424, 0.2
    %v1429 = vmul.f32 %v1425, 0.2
    %v1430 = vsel %vm1426, %v1424, %v1428
    %v1431 = vsel %vm1427, %v1425, %v1429
    %s1432 = scalar_lea.vmem %s10, 32
    %v1433 = vld [vmem:[%s1432] sm:$0xff]
    %v1434 = vld [vmem:[%s1432 + $0x8] sm:$0xff]
    %v1435 = vld [vmem:[%s1432 + $0x10] sm:$0xff]
    %v1436 = vld [vmem:[%s1432 + $0x18] sm:$0xff]
    %s1437 = scalar_lea.vmem %s11, 1
    %v1438 = vld [vmem:[%s1437] sm:$0x1]
    %s1439 = scalar_lea.vmem %s12, 32
    %v1440 = vld [vmem:[%s1439] sm:$0xff]
    %v1441 = vld [vmem:[%s1439 + $0x8] sm:$0xff]
    %v1442 = vld [vmem:[%s1439 + $0x10] sm:$0xff]
    %v1443 = vld [vmem:[%s1439 + $0x18] sm:$0xff]
    %s1444 = scalar_lea.vmem %s13, 1
    %v1445 = vld [vmem:[%s1444] sm:$0x1]
    %v1447 = vlaneseq
    %v1448 = vshrl.u32 %v1447, 7
    %v1449 = vsub.s32 0, %v1448
    %v1450 = vrot.slane %v1445, %v1449
    %v1453 = vsel %vm378, %v1430, 0
    %v1456 = vsel %vm378, %v1431, 0
    %1458 = vmatprep.subr.mxu0 0.0
    %1459 = vmatpush1.msra.mxu0 0.0
    %1460 = vmatprep.subr.mxu0 0.0
    %1461 = vmatpush1.msra.mxu0 0.0
    %1462 = vmatprep.subr.mxu0 0.0
    %1463 = vmatpush1.msra.mxu0 0.0
    %1464 = vmatprep.subr.mxu0 0.0
    %1465 = vmatpush1.msra.mxu0 0.0
    %1466 = vmatprep.subr.mxu0 0.0
    %1467 = vmatpush1.msra.mxu0 0.0
    %1468 = vmatprep.subr.mxu0 0.0
    %1469 = vmatpush1.msra.mxu0 0.0
    %1470 = vmatprep.subr.mxu0 0.0
    %1471 = vmatpush1.msra.mxu0 0.0
    %1472 = vmatprep.subr.mxu0 0.0
    %1473 = vmatpush1.msra.mxu0 0.0
    %1474 = vmatprep.subr.mxu0 0.0
    %1475 = vmatpush1.msra.mxu0 0.0
    %1476 = vmatprep.subr.mxu0 0.0
    %1477 = vmatpush1.msra.mxu0 0.0
    %1478 = vmatprep.subr.mxu0 0.0
    %1479 = vmatpush1.msra.mxu0 0.0
    %1480 = vmatprep.subr.mxu0 0.0
    %1481 = vmatpush1.msra.mxu0 0.0
    %1482 = vmatprep.subr.mxu0 0.0
    %1483 = vmatpush1.msra.mxu0 %v1443
    %1484 = vmatprep.subr.mxu0 0.0
    %1485 = vmatpush1.msra.mxu0 %v1442
    %1486 = vmatprep.subr.mxu0 0.0
    %1487 = vmatpush1.msra.mxu0 %v1441
    %1488 = vmatprep.subr.mxu0 0.0
    %1489 = vmatpush1.msra.mxu0 %v1440
    %1490 = vmatprep.subr.mxu0 0.0
    %1491 = vmatpush2.msra.mxu0 0.0
    %1492 = vmatprep.subr.mxu0 0.0
    %1493 = vmatpush2.msra.mxu0 0.0
    %1494 = vmatprep.subr.mxu0 0.0
    %1495 = vmatpush2.msra.mxu0 0.0
    %1496 = vmatprep.subr.mxu0 0.0
    %1497 = vmatpush2.msra.mxu0 0.0
    %1498 = vmatprep.subr.mxu0 0.0
    %1499 = vmatpush2.msra.mxu0 0.0
    %1500 = vmatprep.subr.mxu0 0.0
    %1501 = vmatpush2.msra.mxu0 0.0
    %1502 = vmatprep.subr.mxu0 0.0
    %1503 = vmatpush2.msra.mxu0 0.0
    %1504 = vmatprep.subr.mxu0 0.0
    %1505 = vmatpush2.msra.mxu0 0.0
    %1506 = vmatprep.subr.mxu0 0.0
    %1507 = vmatpush2.msra.mxu0 0.0
    %1508 = vmatprep.subr.mxu0 0.0
    %1509 = vmatpush2.msra.mxu0 0.0
    %1510 = vmatprep.subr.mxu0 0.0
    %1511 = vmatpush2.msra.mxu0 0.0
    %1512 = vmatprep.subr.mxu0 0.0
    %1513 = vmatpush2.msra.mxu0 0.0
    %1514 = vmatprep.subr.mxu0 0.0
    %1515 = vmatpush2.msra.mxu0 0.0
    %1516 = vmatprep.subr.mxu0 0.0
    %1517 = vmatpush2.msra.mxu0 0.0
    %1518 = vmatprep.subr.mxu0 0.0
    %1519 = vmatpush2.msra.mxu0 0.0
    %1520 = vmatprep.subr.mxu0 0.0
    %1521 = vmatpush2.msra.mxu0 0.0
    %1522 = vmatprep.mubr.f32.mxu0 0.0
    %1523 = vmatmul.mubr.f32.gmra.mxu0 %v1453
    %v1524 = vpop.f32.mrf.mxu0
    %v1525 = vadd.f32 %v1450, %v1524
    %v1526 = vpop.f32.mrf.mxu0
    %1527 = vmatprep.mubr.f32.mxu0 0.0
    %1528 = vmatmul.mubr.f32.gmra.mxu0 %v1456
    %v1529 = vpop.f32.mrf.mxu0
    %v1530 = vadd.f32 %v1450, %v1529
    %v1531 = vpop.f32.mrf.mxu0
    %1532 = vdwg.mxu0
    %1533 = vmatprep.subr.mxu0 0.0
    %1534 = vmatpush1.msra.mxu0 0.0
    %1535 = vmatprep.subr.mxu0 0.0
    %1536 = vmatpush1.msra.mxu0 0.0
    %1537 = vmatprep.subr.mxu0 0.0
    %1538 = vmatpush1.msra.mxu0 0.0
    %1539 = vmatprep.subr.mxu0 0.0
    %1540 = vmatpush1.msra.mxu0 0.0
    %1541 = vmatprep.subr.mxu0 0.0
    %1542 = vmatpush1.msra.mxu0 0.0
    %1543 = vmatprep.subr.mxu0 0.0
    %1544 = vmatpush1.msra.mxu0 0.0
    %1545 = vmatprep.subr.mxu0 0.0
    %1546 = vmatpush1.msra.mxu0 0.0
    %1547 = vmatprep.subr.mxu0 0.0
    %1548 = vmatpush1.msra.mxu0 0.0
    %1549 = vmatprep.subr.mxu0 0.0
    %1550 = vmatpush1.msra.mxu0 0.0
    %1551 = vmatprep.subr.mxu0 0.0
    %1552 = vmatpush1.msra.mxu0 0.0
    %1553 = vmatprep.subr.mxu0 0.0
    %1554 = vmatpush1.msra.mxu0 0.0
    %1555 = vmatprep.subr.mxu0 0.0
    %1556 = vmatpush1.msra.mxu0 0.0
    %1557 = vmatprep.subr.mxu0 0.0
    %1558 = vmatpush1.msra.mxu0 %v1436
    %1559 = vmatprep.subr.mxu0 0.0
    %1560 = vmatpush1.msra.mxu0 %v1435
    %1561 = vmatprep.subr.mxu0 0.0
    %1562 = vmatpush1.msra.mxu0 %v1434
    %1563 = vmatprep.subr.mxu0 0.0
    %1564 = vmatpush1.msra.mxu0 %v1433
    %1565 = vmatprep.subr.mxu0 0.0
    %1566 = vmatpush2.msra.mxu0 0.0
    %1567 = vmatprep.subr.mxu0 0.0
    %1568 = vmatpush2.msra.mxu0 0.0
    %1569 = vmatprep.subr.mxu0 0.0
    %1570 = vmatpush2.msra.mxu0 0.0
    %1571 = vmatprep.subr.mxu0 0.0
    %1572 = vmatpush2.msra.mxu0 0.0
    %1573 = vmatprep.subr.mxu0 0.0
    %1574 = vmatpush2.msra.mxu0 0.0
    %1575 = vmatprep.subr.mxu0 0.0
    %1576 = vmatpush2.msra.mxu0 0.0
    %1577 = vmatprep.subr.mxu0 0.0
    %1578 = vmatpush2.msra.mxu0 0.0
    %1579 = vmatprep.subr.mxu0 0.0
    %1580 = vmatpush2.msra.mxu0 0.0
    %1581 = vmatprep.subr.mxu0 0.0
    %1582 = vmatpush2.msra.mxu0 0.0
    %1583 = vmatprep.subr.mxu0 0.0
    %1584 = vmatpush2.msra.mxu0 0.0
    %1585 = vmatprep.subr.mxu0 0.0
    %1586 = vmatpush2.msra.mxu0 0.0
    %1587 = vmatprep.subr.mxu0 0.0
    %1588 = vmatpush2.msra.mxu0 0.0
    %1589 = vmatprep.subr.mxu0 0.0
    %1590 = vmatpush2.msra.mxu0 0.0
    %1591 = vmatprep.subr.mxu0 0.0
    %1592 = vmatpush2.msra.mxu0 0.0
    %1593 = vmatprep.subr.mxu0 0.0
    %1594 = vmatpush2.msra.mxu0 0.0
    %1595 = vmatprep.subr.mxu0 0.0
    %1596 = vmatpush2.msra.mxu0 0.0
    %1597 = vmatprep.mubr.f32.mxu0 0.0
    %1598 = vmatmul.mubr.f32.gmra.mxu0 %v1453
    %v1599 = vpop.f32.mrf.mxu0
    %v1600 = vadd.f32 0.0, %v1599
    %v1601 = vpop.f32.mrf.mxu0
    %1602 = vmatprep.mubr.f32.mxu0 0.0
    %1603 = vmatmul.mubr.f32.gmra.mxu0 %v1456
    %v1604 = vpop.f32.mrf.mxu0
    %v1605 = vadd.f32 0.0, %v1604
    %v1606 = vpop.f32.mrf.mxu0
    %1607 = vdwg.mxu0
    %v1609 = vlaneseq
    %v1610 = vshrl.u32 %v1609, 7
    %v1611 = vsub.s32 0, %v1610
    %v1612 = vrot.slane %v1438, %v1611
    %1614 = vmatprep.subr.mxu0 0.0
    %1615 = vmatpush1.msra.mxu0 0.0
    %1616 = vmatprep.subr.mxu0 0.0
    %1617 = vmatpush1.msra.mxu0 0.0
    %1618 = vmatprep.subr.mxu0 0.0
    %1619 = vmatpush1.msra.mxu0 0.0
    %1620 = vmatprep.subr.mxu0 0.0
    %1621 = vmatpush1.msra.mxu0 0.0
    %1622 = vmatprep.subr.mxu0 0.0
    %1623 = vmatpush1.msra.mxu0 0.0
    %1624 = vmatprep.subr.mxu0 0.0
    %1625 = vmatpush1.msra.mxu0 0.0
    %1626 = vmatprep.subr.mxu0 0.0
    %1627 = vmatpush1.msra.mxu0 0.0
    %1628 = vmatprep.subr.mxu0 0.0
    %1629 = vmatpush1.msra.mxu0 0.0
    %1630 = vmatprep.subr.mxu0 0.0
    %1631 = vmatpush1.msra.mxu0 0.0
    %1632 = vmatprep.subr.mxu0 0.0
    %1633 = vmatpush1.msra.mxu0 0.0
    %1634 = vmatprep.subr.mxu0 0.0
    %1635 = vmatpush1.msra.mxu0 0.0
    %1636 = vmatprep.subr.mxu0 0.0
    %1637 = vmatpush1.msra.mxu0 0.0
    %1638 = vmatprep.subr.mxu0 0.0
    %1639 = vmatpush1.msra.mxu0 0.0
    %1640 = vmatprep.subr.mxu0 0.0
    %1641 = vmatpush1.msra.mxu0 0.0
    %1642 = vmatprep.subr.mxu0 0.0
    %1643 = vmatpush1.msra.mxu0 %v1605
    %1644 = vmatprep.subr.mxu0 0.0
    %1645 = vmatpush1.msra.mxu0 %v1600
    %1646 = vmatprep.subr.mxu0 0.0
    %1647 = vmatpush2.msra.mxu0 0.0
    %1648 = vmatprep.subr.mxu0 0.0
    %1649 = vmatpush2.msra.mxu0 0.0
    %1650 = vmatprep.subr.mxu0 0.0
    %1651 = vmatpush2.msra.mxu0 0.0
    %1652 = vmatprep.subr.mxu0 0.0
    %1653 = vmatpush2.msra.mxu0 0.0
    %1654 = vmatprep.subr.mxu0 0.0
    %1655 = vmatpush2.msra.mxu0 0.0
    %1656 = vmatprep.subr.mxu0 0.0
    %1657 = vmatpush2.msra.mxu0 0.0
    %1658 = vmatprep.subr.mxu0 0.0
    %1659 = vmatpush2.msra.mxu0 0.0
    %1660 = vmatprep.subr.mxu0 0.0
    %1661 = vmatpush2.msra.mxu0 0.0
    %1662 = vmatprep.subr.mxu0 0.0
    %1663 = vmatpush2.msra.mxu0 0.0
    %1664 = vmatprep.subr.mxu0 0.0
    %1665 = vmatpush2.msra.mxu0 0.0
    %1666 = vmatprep.subr.mxu0 0.0
    %1667 = vmatpush2.msra.mxu0 0.0
    %1668 = vmatprep.subr.mxu0 0.0
    %1669 = vmatpush2.msra.mxu0 0.0
    %1670 = vmatprep.subr.mxu0 0.0
    %1671 = vmatpush2.msra.mxu0 0.0
    %1672 = vmatprep.subr.mxu0 0.0
    %1673 = vmatpush2.msra.mxu0 0.0
    %1674 = vmatprep.subr.mxu0 0.0
    %1675 = vmatpush2.msra.mxu0 0.0
    %1676 = vmatprep.subr.mxu0 0.0
    %1677 = vmatpush2.msra.mxu0 0.0
    %1678 = vmatprep.mubr.f32.mxu0 0.0
    %1679 = vmatmul.mubr.f32.gmra.mxu0 %v986
    %v1680 = vpop.f32.mrf.mxu0
    %v1681 = vadd.f32 %v1612, %v1680
    %v1682 = vpop.f32.mrf.mxu0
    %1683 = vmatprep.mubr.f32.mxu0 0.0
    %1684 = vmatmul.mubr.f32.gmra.mxu0 %v989
    %v1685 = vpop.f32.mrf.mxu0
    %v1686 = vadd.f32 %v1612, %v1685
    %v1687 = vpop.f32.mrf.mxu0
    %1688 = vdwg.mxu0
    %v1689 = vadd.f32 %v1681, %v1525
    %v1690 = vadd.f32 %v1686, %v1530
    %vm1691 = vcmp.ge.f32.partialorder %v1689, 0.0
    %vm1692 = vcmp.ge.f32.partialorder %v1690, 0.0
    %v1693 = vmul.f32 %v1689, 0.2
    %v1694 = vmul.f32 %v1690, 0.2
    %v1695 = vsel %vm1691, %v1689, %v1693
    %v1696 = vsel %vm1692, %v1690, %v1694
    %v1697 = vadd.f32 %v889, %v1695
    %v1698 = vadd.f32 %v890, %v1696
    %s1699 = scalar_lea.vmem %s1, 32
    %v1700 = vld [vmem:[%s1699] sm:$0xff]
    %v1701 = vld [vmem:[%s1699 + $0x8] sm:$0xff]
    %s1702 = scalar_lea.vmem [#allocation4], 32
    %v1703 = vld [vmem:[%s1702] sm:$0xff]
    %v1704 = vld [vmem:[%s1702 + $0x8] sm:$0xff]
    %s1705 = scalar_lea.vmem %s3, 2
    %v1706 = vld [vmem:[%s1705] sm:$0x1]
    %s1707 = scalar_lea.vmem [#allocation6], 32
    %v1708 = vld [vmem:[%s1707] sm:$0xff]
    %v1709 = vld [vmem:[%s1707 + $0x8] sm:$0xff]
    %s1710 = scalar_lea.vmem %s5, 2
    %v1711 = vld [vmem:[%s1710] sm:$0x1]
    %v1713 = vlaneseq
    %v1714 = vshrl.u32 %v1713, 7
    %v1715 = vsub.s32 0, %v1714
    %v1716 = vrot.slane %v1711, %v1715
    %1718 = vmatprep.subr.mxu0 0.0
    %1719 = vmatpush1.msra.mxu0 0.0
    %1720 = vmatprep.subr.mxu0 0.0
    %1721 = vmatpush1.msra.mxu0 0.0
    %1722 = vmatprep.subr.mxu0 0.0
    %1723 = vmatpush1.msra.mxu0 0.0
    %1724 = vmatprep.subr.mxu0 0.0
    %1725 = vmatpush1.msra.mxu0 0.0
    %1726 = vmatprep.subr.mxu0 0.0
    %1727 = vmatpush1.msra.mxu0 0.0
    %1728 = vmatprep.subr.mxu0 0.0
    %1729 = vmatpush1.msra.mxu0 0.0
    %1730 = vmatprep.subr.mxu0 0.0
    %1731 = vmatpush1.msra.mxu0 0.0
    %1732 = vmatprep.subr.mxu0 0.0
    %1733 = vmatpush1.msra.mxu0 0.0
    %1734 = vmatprep.subr.mxu0 0.0
    %1735 = vmatpush1.msra.mxu0 0.0
    %1736 = vmatprep.subr.mxu0 0.0
    %1737 = vmatpush1.msra.mxu0 0.0
    %1738 = vmatprep.subr.mxu0 0.0
    %1739 = vmatpush1.msra.mxu0 0.0
    %1740 = vmatprep.subr.mxu0 0.0
    %1741 = vmatpush1.msra.mxu0 0.0
    %1742 = vmatprep.subr.mxu0 0.0
    %1743 = vmatpush1.msra.mxu0 0.0
    %1744 = vmatprep.subr.mxu0 0.0
    %1745 = vmatpush1.msra.mxu0 0.0
    %1746 = vmatprep.subr.mxu0 0.0
    %1747 = vmatpush1.msra.mxu0 %v1709
    %1748 = vmatprep.subr.mxu0 0.0
    %1749 = vmatpush1.msra.mxu0 %v1708
    %1750 = vmatprep.subr.mxu0 0.0
    %1751 = vmatpush2.msra.mxu0 0.0
    %1752 = vmatprep.subr.mxu0 0.0
    %1753 = vmatpush2.msra.mxu0 0.0
    %1754 = vmatprep.subr.mxu0 0.0
    %1755 = vmatpush2.msra.mxu0 0.0
    %1756 = vmatprep.subr.mxu0 0.0
    %1757 = vmatpush2.msra.mxu0 0.0
    %1758 = vmatprep.subr.mxu0 0.0
    %1759 = vmatpush2.msra.mxu0 0.0
    %1760 = vmatprep.subr.mxu0 0.0
    %1761 = vmatpush2.msra.mxu0 0.0
    %1762 = vmatprep.subr.mxu0 0.0
    %1763 = vmatpush2.msra.mxu0 0.0
    %1764 = vmatprep.subr.mxu0 0.0
    %1765 = vmatpush2.msra.mxu0 0.0
    %1766 = vmatprep.subr.mxu0 0.0
    %1767 = vmatpush2.msra.mxu0 0.0
    %1768 = vmatprep.subr.mxu0 0.0
    %1769 = vmatpush2.msra.mxu0 0.0
    %1770 = vmatprep.subr.mxu0 0.0
    %1771 = vmatpush2.msra.mxu0 0.0
    %1772 = vmatprep.subr.mxu0 0.0
    %1773 = vmatpush2.msra.mxu0 0.0
    %1774 = vmatprep.subr.mxu0 0.0
    %1775 = vmatpush2.msra.mxu0 0.0
    %1776 = vmatprep.subr.mxu0 0.0
    %1777 = vmatpush2.msra.mxu0 0.0
    %1778 = vmatprep.subr.mxu0 0.0
    %1779 = vmatpush2.msra.mxu0 0.0
    %1780 = vmatprep.subr.mxu0 0.0
    %1781 = vmatpush2.msra.mxu0 0.0
    %1782 = vmatprep.mubr.f32.mxu0 0.0
    %1783 = vmatmul.mubr.f32.gmra.mxu0 %v106
    %v1784 = vpop.f32.mrf.mxu0
    %v1785 = vadd.f32 %v1716, %v1784
    %v1786 = vpop.f32.mrf.mxu0
    %1787 = vmatprep.mubr.f32.mxu0 0.0
    %1788 = vmatmul.mubr.f32.gmra.mxu0 %v109
    %v1789 = vpop.f32.mrf.mxu0
    %v1790 = vadd.f32 %v1716, %v1789
    %v1791 = vpop.f32.mrf.mxu0
    %1792 = vdwg.mxu0
    %v1794 = vsel %vm104, %v1700, 0
    %v1797 = vsel %vm104, %v1701, 0
    %1799 = vmatprep.subr.mxu0 0.0
    %1800 = vmatpush1.msra.mxu0 0.0
    %1801 = vmatprep.subr.mxu0 0.0
    %1802 = vmatpush1.msra.mxu0 0.0
    %1803 = vmatprep.subr.mxu0 0.0
    %1804 = vmatpush1.msra.mxu0 0.0
    %1805 = vmatprep.subr.mxu0 0.0
    %1806 = vmatpush1.msra.mxu0 0.0
    %1807 = vmatprep.subr.mxu0 0.0
    %1808 = vmatpush1.msra.mxu0 0.0
    %1809 = vmatprep.subr.mxu0 0.0
    %1810 = vmatpush1.msra.mxu0 0.0
    %1811 = vmatprep.subr.mxu0 0.0
    %1812 = vmatpush1.msra.mxu0 0.0
    %1813 = vmatprep.subr.mxu0 0.0
    %1814 = vmatpush1.msra.mxu0 0.0
    %1815 = vmatprep.subr.mxu0 0.0
    %1816 = vmatpush1.msra.mxu0 0.0
    %1817 = vmatprep.subr.mxu0 0.0
    %1818 = vmatpush1.msra.mxu0 0.0
    %1819 = vmatprep.subr.mxu0 0.0
    %1820 = vmatpush1.msra.mxu0 0.0
    %1821 = vmatprep.subr.mxu0 0.0
    %1822 = vmatpush1.msra.mxu0 0.0
    %1823 = vmatprep.subr.mxu0 0.0
    %1824 = vmatpush1.msra.mxu0 0.0
    %1825 = vmatprep.subr.mxu0 0.0
    %1826 = vmatpush1.msra.mxu0 0.0
    %1827 = vmatprep.subr.mxu0 0.0
    %1828 = vmatpush1.msra.mxu0 %v89
    %1829 = vmatprep.subr.mxu0 0.0
    %1830 = vmatpush1.msra.mxu0 %v88
    %1831 = vmatprep.subr.mxu0 0.0
    %1832 = vmatpush2.msra.mxu0 0.0
    %1833 = vmatprep.subr.mxu0 0.0
    %1834 = vmatpush2.msra.mxu0 0.0
    %1835 = vmatprep.subr.mxu0 0.0
    %1836 = vmatpush2.msra.mxu0 0.0
    %1837 = vmatprep.subr.mxu0 0.0
    %1838 = vmatpush2.msra.mxu0 0.0
    %1839 = vmatprep.subr.mxu0 0.0
    %1840 = vmatpush2.msra.mxu0 0.0
    %1841 = vmatprep.subr.mxu0 0.0
    %1842 = vmatpush2.msra.mxu0 0.0
    %1843 = vmatprep.subr.mxu0 0.0
    %1844 = vmatpush2.msra.mxu0 0.0
    %1845 = vmatprep.subr.mxu0 0.0
    %1846 = vmatpush2.msra.mxu0 0.0
    %1847 = vmatprep.subr.mxu0 0.0
    %1848 = vmatpush2.msra.mxu0 0.0
    %1849 = vmatprep.subr.mxu0 0.0
    %1850 = vmatpush2.msra.mxu0 0.0
    %1851 = vmatprep.subr.mxu0 0.0
    %1852 = vmatpush2.msra.mxu0 0.0
    %1853 = vmatprep.subr.mxu0 0.0
    %1854 = vmatpush2.msra.mxu0 0.0
    %1855 = vmatprep.subr.mxu0 0.0
    %1856 = vmatpush2.msra.mxu0 0.0
    %1857 = vmatprep.subr.mxu0 0.0
    %1858 = vmatpush2.msra.mxu0 0.0
    %1859 = vmatprep.subr.mxu0 0.0
    %1860 = vmatpush2.msra.mxu0 0.0
    %1861 = vmatprep.subr.mxu0 0.0
    %1862 = vmatpush2.msra.mxu0 0.0
    %1863 = vmatprep.mubr.f32.mxu0 0.0
    %1864 = vmatmul.mubr.f32.gmra.mxu0 %v1794
    %v1865 = vpop.f32.mrf.mxu0
    %v1866 = vadd.f32 0.0, %v1865
    %v1867 = vpop.f32.mrf.mxu0
    %1868 = vmatprep.mubr.f32.mxu0 0.0
    %1869 = vmatmul.mubr.f32.gmra.mxu0 %v1797
    %v1870 = vpop.f32.mrf.mxu0
    %v1871 = vadd.f32 0.0, %v1870
    %v1872 = vpop.f32.mrf.mxu0
    %1873 = vdwg.mxu0
    %v1875 = vlaneseq
    %v1876 = vshrl.u32 %v1875, 7
    %v1877 = vsub.s32 0, %v1876
    %v1878 = vrot.slane %v1706, %v1877
    %v1881 = vsel %vm104, %v1866, 0
    %v1884 = vsel %vm104, %v1871, 0
    %1886 = vmatprep.subr.mxu0 0.0
    %1887 = vmatpush1.msra.mxu0 0.0
    %1888 = vmatprep.subr.mxu0 0.0
    %1889 = vmatpush1.msra.mxu0 0.0
    %1890 = vmatprep.subr.mxu0 0.0
    %1891 = vmatpush1.msra.mxu0 0.0
    %1892 = vmatprep.subr.mxu0 0.0
    %1893 = vmatpush1.msra.mxu0 0.0
    %1894 = vmatprep.subr.mxu0 0.0
    %1895 = vmatpush1.msra.mxu0 0.0
    %1896 = vmatprep.subr.mxu0 0.0
    %1897 = vmatpush1.msra.mxu0 0.0
    %1898 = vmatprep.subr.mxu0 0.0
    %1899 = vmatpush1.msra.mxu0 0.0
    %1900 = vmatprep.subr.mxu0 0.0
    %1901 = vmatpush1.msra.mxu0 0.0
    %1902 = vmatprep.subr.mxu0 0.0
    %1903 = vmatpush1.msra.mxu0 0.0
    %1904 = vmatprep.subr.mxu0 0.0
    %1905 = vmatpush1.msra.mxu0 0.0
    %1906 = vmatprep.subr.mxu0 0.0
    %1907 = vmatpush1.msra.mxu0 0.0
    %1908 = vmatprep.subr.mxu0 0.0
    %1909 = vmatpush1.msra.mxu0 0.0
    %1910 = vmatprep.subr.mxu0 0.0
    %1911 = vmatpush1.msra.mxu0 0.0
    %1912 = vmatprep.subr.mxu0 0.0
    %1913 = vmatpush1.msra.mxu0 0.0
    %1914 = vmatprep.subr.mxu0 0.0
    %1915 = vmatpush1.msra.mxu0 %v1704
    %1916 = vmatprep.subr.mxu0 0.0
    %1917 = vmatpush1.msra.mxu0 %v1703
    %1918 = vmatprep.subr.mxu0 0.0
    %1919 = vmatpush2.msra.mxu0 0.0
    %1920 = vmatprep.subr.mxu0 0.0
    %1921 = vmatpush2.msra.mxu0 0.0
    %1922 = vmatprep.subr.mxu0 0.0
    %1923 = vmatpush2.msra.mxu0 0.0
    %1924 = vmatprep.subr.mxu0 0.0
    %1925 = vmatpush2.msra.mxu0 0.0
    %1926 = vmatprep.subr.mxu0 0.0
    %1927 = vmatpush2.msra.mxu0 0.0
    %1928 = vmatprep.subr.mxu0 0.0
    %1929 = vmatpush2.msra.mxu0 0.0
    %1930 = vmatprep.subr.mxu0 0.0
    %1931 = vmatpush2.msra.mxu0 0.0
    %1932 = vmatprep.subr.mxu0 0.0
    %1933 = vmatpush2.msra.mxu0 0.0
    %1934 = vmatprep.subr.mxu0 0.0
    %1935 = vmatpush2.msra.mxu0 0.0
    %1936 = vmatprep.subr.mxu0 0.0
    %1937 = vmatpush2.msra.mxu0 0.0
    %1938 = vmatprep.subr.mxu0 0.0
    %1939 = vmatpush2.msra.mxu0 0.0
    %1940 = vmatprep.subr.mxu0 0.0
    %1941 = vmatpush2.msra.mxu0 0.0
    %1942 = vmatprep.subr.mxu0 0.0
    %1943 = vmatpush2.msra.mxu0 0.0
    %1944 = vmatprep.subr.mxu0 0.0
    %1945 = vmatpush2.msra.mxu0 0.0
    %1946 = vmatprep.subr.mxu0 0.0
    %1947 = vmatpush2.msra.mxu0 0.0
    %1948 = vmatprep.subr.mxu0 0.0
    %1949 = vmatpush2.msra.mxu0 0.0
    %1950 = vmatprep.mubr.f32.mxu0 0.0
    %1951 = vmatmul.mubr.f32.gmra.mxu0 %v1881
    %v1952 = vpop.f32.mrf.mxu0
    %v1953 = vadd.f32 %v1878, %v1952
    %v1954 = vpop.f32.mrf.mxu0
    %1955 = vmatprep.mubr.f32.mxu0 0.0
    %1956 = vmatmul.mubr.f32.gmra.mxu0 %v1884
    %v1957 = vpop.f32.mrf.mxu0
    %v1958 = vadd.f32 %v1878, %v1957
    %v1959 = vpop.f32.mrf.mxu0
    %1960 = vdwg.mxu0
    %v1961 = vadd.f32 %v1953, %v1785
    %v1962 = vadd.f32 %v1958, %v1790
    %vm1963 = vcmp.ge.f32.partialorder %v1961, 0.0
    %vm1964 = vcmp.ge.f32.partialorder %v1962, 0.0
    %v1965 = vmul.f32 %v1961, 0.2
    %v1966 = vmul.f32 %v1962, 0.2
    %v1967 = vsel %vm1963, %v1961, %v1965
    %v1968 = vsel %vm1964, %v1962, %v1966
    %s1969 = scalar_lea.vmem %s6, 64
    %v1970 = vld [vmem:[%s1969] sm:$0xff]
    %v1971 = vld [vmem:[%s1969 + $0x8] sm:$0xff]
    %v1972 = vld [vmem:[%s1969 + $0x10] sm:$0xff]
    %v1973 = vld [vmem:[%s1969 + $0x18] sm:$0xff]
    %s1974 = scalar_lea.vmem %s7, 2
    %v1975 = vld [vmem:[%s1974] sm:$0x1]
    %s1976 = scalar_lea.vmem %s8, 64
    %v1977 = vld [vmem:[%s1976] sm:$0xff]
    %v1978 = vld [vmem:[%s1976 + $0x8] sm:$0xff]
    %v1979 = vld [vmem:[%s1976 + $0x10] sm:$0xff]
    %v1980 = vld [vmem:[%s1976 + $0x18] sm:$0xff]
    %s1981 = scalar_lea.vmem %s9, 2
    %v1982 = vld [vmem:[%s1981] sm:$0x1]
    %v1984 = vlaneseq
    %v1985 = vshrl.u32 %v1984, 7
    %v1986 = vsub.s32 0, %v1985
    %v1987 = vrot.slane %v1982, %v1986
    %v1990 = vsel %vm378, %v1967, 0
    %v1993 = vsel %vm378, %v1968, 0
    %1995 = vmatprep.subr.mxu0 0.0
    %1996 = vmatpush1.msra.mxu0 0.0
    %1997 = vmatprep.subr.mxu0 0.0
    %1998 = vmatpush1.msra.mxu0 0.0
    %1999 = vmatprep.subr.mxu0 0.0
    %2000 = vmatpush1.msra.mxu0 0.0
    %2001 = vmatprep.subr.mxu0 0.0
    %2002 = vmatpush1.msra.mxu0 0.0
    %2003 = vmatprep.subr.mxu0 0.0
    %2004 = vmatpush1.msra.mxu0 0.0
    %2005 = vmatprep.subr.mxu0 0.0
    %2006 = vmatpush1.msra.mxu0 0.0
    %2007 = vmatprep.subr.mxu0 0.0
    %2008 = vmatpush1.msra.mxu0 0.0
    %2009 = vmatprep.subr.mxu0 0.0
    %2010 = vmatpush1.msra.mxu0 0.0
    %2011 = vmatprep.subr.mxu0 0.0
    %2012 = vmatpush1.msra.mxu0 0.0
    %2013 = vmatprep.subr.mxu0 0.0
    %2014 = vmatpush1.msra.mxu0 0.0
    %2015 = vmatprep.subr.mxu0 0.0
    %2016 = vmatpush1.msra.mxu0 0.0
    %2017 = vmatprep.subr.mxu0 0.0
    %2018 = vmatpush1.msra.mxu0 0.0
    %2019 = vmatprep.subr.mxu0 0.0
    %2020 = vmatpush1.msra.mxu0 %v1980
    %2021 = vmatprep.subr.mxu0 0.0
    %2022 = vmatpush1.msra.mxu0 %v1979
    %2023 = vmatprep.subr.mxu0 0.0
    %2024 = vmatpush1.msra.mxu0 %v1978
    %2025 = vmatprep.subr.mxu0 0.0
    %2026 = vmatpush1.msra.mxu0 %v1977
    %2027 = vmatprep.subr.mxu0 0.0
    %2028 = vmatpush2.msra.mxu0 0.0
    %2029 = vmatprep.subr.mxu0 0.0
    %2030 = vmatpush2.msra.mxu0 0.0
    %2031 = vmatprep.subr.mxu0 0.0
    %2032 = vmatpush2.msra.mxu0 0.0
    %2033 = vmatprep.subr.mxu0 0.0
    %2034 = vmatpush2.msra.mxu0 0.0
    %2035 = vmatprep.subr.mxu0 0.0
    %2036 = vmatpush2.msra.mxu0 0.0
    %2037 = vmatprep.subr.mxu0 0.0
    %2038 = vmatpush2.msra.mxu0 0.0
    %2039 = vmatprep.subr.mxu0 0.0
    %2040 = vmatpush2.msra.mxu0 0.0
    %2041 = vmatprep.subr.mxu0 0.0
    %2042 = vmatpush2.msra.mxu0 0.0
    %2043 = vmatprep.subr.mxu0 0.0
    %2044 = vmatpush2.msra.mxu0 0.0
    %2045 = vmatprep.subr.mxu0 0.0
    %2046 = vmatpush2.msra.mxu0 0.0
    %2047 = vmatprep.subr.mxu0 0.0
    %2048 = vmatpush2.msra.mxu0 0.0
    %2049 = vmatprep.subr.mxu0 0.0
    %2050 = vmatpush2.msra.mxu0 0.0
    %2051 = vmatprep.subr.mxu0 0.0
    %2052 = vmatpush2.msra.mxu0 0.0
    %2053 = vmatprep.subr.mxu0 0.0
    %2054 = vmatpush2.msra.mxu0 0.0
    %2055 = vmatprep.subr.mxu0 0.0
    %2056 = vmatpush2.msra.mxu0 0.0
    %2057 = vmatprep.subr.mxu0 0.0
    %2058 = vmatpush2.msra.mxu0 0.0
    %2059 = vmatprep.mubr.f32.mxu0 0.0
    %2060 = vmatmul.mubr.f32.gmra.mxu0 %v1990
    %v2061 = vpop.f32.mrf.mxu0
    %v2062 = vadd.f32 %v1987, %v2061
    %v2063 = vpop.f32.mrf.mxu0
    %2064 = vmatprep.mubr.f32.mxu0 0.0
    %2065 = vmatmul.mubr.f32.gmra.mxu0 %v1993
    %v2066 = vpop.f32.mrf.mxu0
    %v2067 = vadd.f32 %v1987, %v2066
    %v2068 = vpop.f32.mrf.mxu0
    %2069 = vdwg.mxu0
    %2070 = vmatprep.subr.mxu0 0.0
    %2071 = vmatpush1.msra.mxu0 0.0
    %2072 = vmatprep.subr.mxu0 0.0
    %2073 = vmatpush1.msra.mxu0 0.0
    %2074 = vmatprep.subr.mxu0 0.0
    %2075 = vmatpush1.msra.mxu0 0.0
    %2076 = vmatprep.subr.mxu0 0.0
    %2077 = vmatpush1.msra.mxu0 0.0
    %2078 = vmatprep.subr.mxu0 0.0
    %2079 = vmatpush1.msra.mxu0 0.0
    %2080 = vmatprep.subr.mxu0 0.0
    %2081 = vmatpush1.msra.mxu0 0.0
    %2082 = vmatprep.subr.mxu0 0.0
    %2083 = vmatpush1.msra.mxu0 0.0
    %2084 = vmatprep.subr.mxu0 0.0
    %2085 = vmatpush1.msra.mxu0 0.0
    %2086 = vmatprep.subr.mxu0 0.0
    %2087 = vmatpush1.msra.mxu0 0.0
    %2088 = vmatprep.subr.mxu0 0.0
    %2089 = vmatpush1.msra.mxu0 0.0
    %2090 = vmatprep.subr.mxu0 0.0
    %2091 = vmatpush1.msra.mxu0 0.0
    %2092 = vmatprep.subr.mxu0 0.0
    %2093 = vmatpush1.msra.mxu0 0.0
    %2094 = vmatprep.subr.mxu0 0.0
    %2095 = vmatpush1.msra.mxu0 0.0
    %2096 = vmatprep.subr.mxu0 0.0
    %2097 = vmatpush1.msra.mxu0 0.0
    %2098 = vmatprep.subr.mxu0 0.0
    %2099 = vmatpush1.msra.mxu0 %v1968
    %2100 = vmatprep.subr.mxu0 0.0
    %2101 = vmatpush1.msra.mxu0 %v1967
    %2102 = vmatprep.subr.mxu0 0.0
    %2103 = vmatpush2.msra.mxu0 0.0
    %2104 = vmatprep.subr.mxu0 0.0
    %2105 = vmatpush2.msra.mxu0 0.0
    %2106 = vmatprep.subr.mxu0 0.0
    %2107 = vmatpush2.msra.mxu0 0.0
    %2108 = vmatprep.subr.mxu0 0.0
    %2109 = vmatpush2.msra.mxu0 0.0
    %2110 = vmatprep.subr.mxu0 0.0
    %2111 = vmatpush2.msra.mxu0 0.0
    %2112 = vmatprep.subr.mxu0 0.0
    %2113 = vmatpush2.msra.mxu0 0.0
    %2114 = vmatprep.subr.mxu0 0.0
    %2115 = vmatpush2.msra.mxu0 0.0
    %2116 = vmatprep.subr.mxu0 0.0
    %2117 = vmatpush2.msra.mxu0 0.0
    %2118 = vmatprep.subr.mxu0 0.0
    %2119 = vmatpush2.msra.mxu0 0.0
    %2120 = vmatprep.subr.mxu0 0.0
    %2121 = vmatpush2.msra.mxu0 0.0
    %2122 = vmatprep.subr.mxu0 0.0
    %2123 = vmatpush2.msra.mxu0 0.0
    %2124 = vmatprep.subr.mxu0 0.0
    %2125 = vmatpush2.msra.mxu0 0.0
    %2126 = vmatprep.subr.mxu0 0.0
    %2127 = vmatpush2.msra.mxu0 0.0
    %2128 = vmatprep.subr.mxu0 0.0
    %2129 = vmatpush2.msra.mxu0 0.0
    %2130 = vmatprep.subr.mxu0 0.0
    %2131 = vmatpush2.msra.mxu0 0.0
    %2132 = vmatprep.subr.mxu0 0.0
    %2133 = vmatpush2.msra.mxu0 0.0
    %2134 = vmatprep.mubr.f32.mxu0 0.0
    %2135 = vmatmul.mubr.f32.gmra.mxu0 %v1794
    %v2136 = vpop.f32.mrf.mxu0
    %v2137 = vadd.f32 0.0, %v2136
    %v2138 = vpop.f32.mrf.mxu0
    %2139 = vmatprep.mubr.f32.mxu0 0.0
    %2140 = vmatmul.mubr.f32.gmra.mxu0 %v1797
    %v2141 = vpop.f32.mrf.mxu0
    %v2142 = vadd.f32 0.0, %v2141
    %v2143 = vpop.f32.mrf.mxu0
    %2144 = vdwg.mxu0
    %v2146 = vlaneseq
    %v2147 = vshrl.u32 %v2146, 7
    %v2148 = vsub.s32 0, %v2147
    %v2149 = vrot.slane %v1975, %v2148
    %v2152 = vsel %vm378, %v2137, 0
    %v2155 = vsel %vm378, %v2142, 0
    %2157 = vmatprep.subr.mxu0 0.0
    %2158 = vmatpush1.msra.mxu0 0.0
    %2159 = vmatprep.subr.mxu0 0.0
    %2160 = vmatpush1.msra.mxu0 0.0
    %2161 = vmatprep.subr.mxu0 0.0
    %2162 = vmatpush1.msra.mxu0 0.0
    %2163 = vmatprep.subr.mxu0 0.0
    %2164 = vmatpush1.msra.mxu0 0.0
    %2165 = vmatprep.subr.mxu0 0.0
    %2166 = vmatpush1.msra.mxu0 0.0
    %2167 = vmatprep.subr.mxu0 0.0
    %2168 = vmatpush1.msra.mxu0 0.0
    %2169 = vmatprep.subr.mxu0 0.0
    %2170 = vmatpush1.msra.mxu0 0.0
    %2171 = vmatprep.subr.mxu0 0.0
    %2172 = vmatpush1.msra.mxu0 0.0
    %2173 = vmatprep.subr.mxu0 0.0
    %2174 = vmatpush1.msra.mxu0 0.0
    %2175 = vmatprep.subr.mxu0 0.0
    %2176 = vmatpush1.msra.mxu0 0.0
    %2177 = vmatprep.subr.mxu0 0.0
    %2178 = vmatpush1.msra.mxu0 0.0
    %2179 = vmatprep.subr.mxu0 0.0
    %2180 = vmatpush1.msra.mxu0 0.0
    %2181 = vmatprep.subr.mxu0 0.0
    %2182 = vmatpush1.msra.mxu0 %v1973
    %2183 = vmatprep.subr.mxu0 0.0
    %2184 = vmatpush1.msra.mxu0 %v1972
    %2185 = vmatprep.subr.mxu0 0.0
    %2186 = vmatpush1.msra.mxu0 %v1971
    %2187 = vmatprep.subr.mxu0 0.0
    %2188 = vmatpush1.msra.mxu0 %v1970
    %2189 = vmatprep.subr.mxu0 0.0
    %2190 = vmatpush2.msra.mxu0 0.0
    %2191 = vmatprep.subr.mxu0 0.0
    %2192 = vmatpush2.msra.mxu0 0.0
    %2193 = vmatprep.subr.mxu0 0.0
    %2194 = vmatpush2.msra.mxu0 0.0
    %2195 = vmatprep.subr.mxu0 0.0
    %2196 = vmatpush2.msra.mxu0 0.0
    %2197 = vmatprep.subr.mxu0 0.0
    %2198 = vmatpush2.msra.mxu0 0.0
    %2199 = vmatprep.subr.mxu0 0.0
    %2200 = vmatpush2.msra.mxu0 0.0
    %2201 = vmatprep.subr.mxu0 0.0
    %2202 = vmatpush2.msra.mxu0 0.0
    %2203 = vmatprep.subr.mxu0 0.0
    %2204 = vmatpush2.msra.mxu0 0.0
    %2205 = vmatprep.subr.mxu0 0.0
    %2206 = vmatpush2.msra.mxu0 0.0
    %2207 = vmatprep.subr.mxu0 0.0
    %2208 = vmatpush2.msra.mxu0 0.0
    %2209 = vmatprep.subr.mxu0 0.0
    %2210 = vmatpush2.msra.mxu0 0.0
    %2211 = vmatprep.subr.mxu0 0.0
    %2212 = vmatpush2.msra.mxu0 0.0
    %2213 = vmatprep.subr.mxu0 0.0
    %2214 = vmatpush2.msra.mxu0 0.0
    %2215 = vmatprep.subr.mxu0 0.0
    %2216 = vmatpush2.msra.mxu0 0.0
    %2217 = vmatprep.subr.mxu0 0.0
    %2218 = vmatpush2.msra.mxu0 0.0
    %2219 = vmatprep.subr.mxu0 0.0
    %2220 = vmatpush2.msra.mxu0 0.0
    %2221 = vmatprep.mubr.f32.mxu0 0.0
    %2222 = vmatmul.mubr.f32.gmra.mxu0 %v2152
    %v2223 = vpop.f32.mrf.mxu0
    %v2224 = vadd.f32 %v2149, %v2223
    %v2225 = vpop.f32.mrf.mxu0
    %2226 = vmatprep.mubr.f32.mxu0 0.0
    %2227 = vmatmul.mubr.f32.gmra.mxu0 %v2155
    %v2228 = vpop.f32.mrf.mxu0
    %v2229 = vadd.f32 %v2149, %v2228
    %v2230 = vpop.f32.mrf.mxu0
    %2231 = vdwg.mxu0
    %v2232 = vadd.f32 %v2224, %v2062
    %v2233 = vadd.f32 %v2229, %v2067
    %vm2234 = vcmp.ge.f32.partialorder %v2232, 0.0
    %vm2235 = vcmp.ge.f32.partialorder %v2233, 0.0
    %v2236 = vmul.f32 %v2232, 0.2
    %v2237 = vmul.f32 %v2233, 0.2
    %v2238 = vsel %vm2234, %v2232, %v2236
    %v2239 = vsel %vm2235, %v2233, %v2237
    %s2240 = scalar_lea.vmem %s10, 64
    %v2241 = vld [vmem:[%s2240] sm:$0xff]
    %v2242 = vld [vmem:[%s2240 + $0x8] sm:$0xff]
    %v2243 = vld [vmem:[%s2240 + $0x10] sm:$0xff]
    %v2244 = vld [vmem:[%s2240 + $0x18] sm:$0xff]
    %s2245 = scalar_lea.vmem %s11, 2
    %v2246 = vld [vmem:[%s2245] sm:$0x1]
    %s2247 = scalar_lea.vmem %s12, 64
    %v2248 = vld [vmem:[%s2247] sm:$0xff]
    %v2249 = vld [vmem:[%s2247 + $0x8] sm:$0xff]
    %v2250 = vld [vmem:[%s2247 + $0x10] sm:$0xff]
    %v2251 = vld [vmem:[%s2247 + $0x18] sm:$0xff]
    %s2252 = scalar_lea.vmem %s13, 2
    %v2253 = vld [vmem:[%s2252] sm:$0x1]
    %v2255 = vlaneseq
    %v2256 = vshrl.u32 %v2255, 7
    %v2257 = vsub.s32 0, %v2256
    %v2258 = vrot.slane %v2253, %v2257
    %v2261 = vsel %vm378, %v2238, 0
    %v2264 = vsel %vm378, %v2239, 0
    %2266 = vmatprep.subr.mxu0 0.0
    %2267 = vmatpush1.msra.mxu0 0.0
    %2268 = vmatprep.subr.mxu0 0.0
    %2269 = vmatpush1.msra.mxu0 0.0
    %2270 = vmatprep.subr.mxu0 0.0
    %2271 = vmatpush1.msra.mxu0 0.0
    %2272 = vmatprep.subr.mxu0 0.0
    %2273 = vmatpush1.msra.mxu0 0.0
    %2274 = vmatprep.subr.mxu0 0.0
    %2275 = vmatpush1.msra.mxu0 0.0
    %2276 = vmatprep.subr.mxu0 0.0
    %2277 = vmatpush1.msra.mxu0 0.0
    %2278 = vmatprep.subr.mxu0 0.0
    %2279 = vmatpush1.msra.mxu0 0.0
    %2280 = vmatprep.subr.mxu0 0.0
    %2281 = vmatpush1.msra.mxu0 0.0
    %2282 = vmatprep.subr.mxu0 0.0
    %2283 = vmatpush1.msra.mxu0 0.0
    %2284 = vmatprep.subr.mxu0 0.0
    %2285 = vmatpush1.msra.mxu0 0.0
    %2286 = vmatprep.subr.mxu0 0.0
    %2287 = vmatpush1.msra.mxu0 0.0
    %2288 = vmatprep.subr.mxu0 0.0
    %2289 = vmatpush1.msra.mxu0 0.0
    %2290 = vmatprep.subr.mxu0 0.0
    %2291 = vmatpush1.msra.mxu0 %v2251
    %2292 = vmatprep.subr.mxu0 0.0
    %2293 = vmatpush1.msra.mxu0 %v2250
    %2294 = vmatprep.subr.mxu0 0.0
    %2295 = vmatpush1.msra.mxu0 %v2249
    %2296 = vmatprep.subr.mxu0 0.0
    %2297 = vmatpush1.msra.mxu0 %v2248
    %2298 = vmatprep.subr.mxu0 0.0
    %2299 = vmatpush2.msra.mxu0 0.0
    %2300 = vmatprep.subr.mxu0 0.0
    %2301 = vmatpush2.msra.mxu0 0.0
    %2302 = vmatprep.subr.mxu0 0.0
    %2303 = vmatpush2.msra.mxu0 0.0
    %2304 = vmatprep.subr.mxu0 0.0
    %2305 = vmatpush2.msra.mxu0 0.0
    %2306 = vmatprep.subr.mxu0 0.0
    %2307 = vmatpush2.msra.mxu0 0.0
    %2308 = vmatprep.subr.mxu0 0.0
    %2309 = vmatpush2.msra.mxu0 0.0
    %2310 = vmatprep.subr.mxu0 0.0
    %2311 = vmatpush2.msra.mxu0 0.0
    %2312 = vmatprep.subr.mxu0 0.0
    %2313 = vmatpush2.msra.mxu0 0.0
    %2314 = vmatprep.subr.mxu0 0.0
    %2315 = vmatpush2.msra.mxu0 0.0
    %2316 = vmatprep.subr.mxu0 0.0
    %2317 = vmatpush2.msra.mxu0 0.0
    %2318 = vmatprep.subr.mxu0 0.0
    %2319 = vmatpush2.msra.mxu0 0.0
    %2320 = vmatprep.subr.mxu0 0.0
    %2321 = vmatpush2.msra.mxu0 0.0
    %2322 = vmatprep.subr.mxu0 0.0
    %2323 = vmatpush2.msra.mxu0 0.0
    %2324 = vmatprep.subr.mxu0 0.0
    %2325 = vmatpush2.msra.mxu0 0.0
    %2326 = vmatprep.subr.mxu0 0.0
    %2327 = vmatpush2.msra.mxu0 0.0
    %2328 = vmatprep.subr.mxu0 0.0
    %2329 = vmatpush2.msra.mxu0 0.0
    %2330 = vmatprep.mubr.f32.mxu0 0.0
    %2331 = vmatmul.mubr.f32.gmra.mxu0 %v2261
    %v2332 = vpop.f32.mrf.mxu0
    %v2333 = vadd.f32 %v2258, %v2332
    %v2334 = vpop.f32.mrf.mxu0
    %2335 = vmatprep.mubr.f32.mxu0 0.0
    %2336 = vmatmul.mubr.f32.gmra.mxu0 %v2264
    %v2337 = vpop.f32.mrf.mxu0
    %v2338 = vadd.f32 %v2258, %v2337
    %v2339 = vpop.f32.mrf.mxu0
    %2340 = vdwg.mxu0
    %2341 = vmatprep.subr.mxu0 0.0
    %2342 = vmatpush1.msra.mxu0 0.0
    %2343 = vmatprep.subr.mxu0 0.0
    %2344 = vmatpush1.msra.mxu0 0.0
    %2345 = vmatprep.subr.mxu0 0.0
    %2346 = vmatpush1.msra.mxu0 0.0
    %2347 = vmatprep.subr.mxu0 0.0
    %2348 = vmatpush1.msra.mxu0 0.0
    %2349 = vmatprep.subr.mxu0 0.0
    %2350 = vmatpush1.msra.mxu0 0.0
    %2351 = vmatprep.subr.mxu0 0.0
    %2352 = vmatpush1.msra.mxu0 0.0
    %2353 = vmatprep.subr.mxu0 0.0
    %2354 = vmatpush1.msra.mxu0 0.0
    %2355 = vmatprep.subr.mxu0 0.0
    %2356 = vmatpush1.msra.mxu0 0.0
    %2357 = vmatprep.subr.mxu0 0.0
    %2358 = vmatpush1.msra.mxu0 0.0
    %2359 = vmatprep.subr.mxu0 0.0
    %2360 = vmatpush1.msra.mxu0 0.0
    %2361 = vmatprep.subr.mxu0 0.0
    %2362 = vmatpush1.msra.mxu0 0.0
    %2363 = vmatprep.subr.mxu0 0.0
    %2364 = vmatpush1.msra.mxu0 0.0
    %2365 = vmatprep.subr.mxu0 0.0
    %2366 = vmatpush1.msra.mxu0 %v2244
    %2367 = vmatprep.subr.mxu0 0.0
    %2368 = vmatpush1.msra.mxu0 %v2243
    %2369 = vmatprep.subr.mxu0 0.0
    %2370 = vmatpush1.msra.mxu0 %v2242
    %2371 = vmatprep.subr.mxu0 0.0
    %2372 = vmatpush1.msra.mxu0 %v2241
    %2373 = vmatprep.subr.mxu0 0.0
    %2374 = vmatpush2.msra.mxu0 0.0
    %2375 = vmatprep.subr.mxu0 0.0
    %2376 = vmatpush2.msra.mxu0 0.0
    %2377 = vmatprep.subr.mxu0 0.0
    %2378 = vmatpush2.msra.mxu0 0.0
    %2379 = vmatprep.subr.mxu0 0.0
    %2380 = vmatpush2.msra.mxu0 0.0
    %2381 = vmatprep.subr.mxu0 0.0
    %2382 = vmatpush2.msra.mxu0 0.0
    %2383 = vmatprep.subr.mxu0 0.0
    %2384 = vmatpush2.msra.mxu0 0.0
    %2385 = vmatprep.subr.mxu0 0.0
    %2386 = vmatpush2.msra.mxu0 0.0
    %2387 = vmatprep.subr.mxu0 0.0
    %2388 = vmatpush2.msra.mxu0 0.0
    %2389 = vmatprep.subr.mxu0 0.0
    %2390 = vmatpush2.msra.mxu0 0.0
    %2391 = vmatprep.subr.mxu0 0.0
    %2392 = vmatpush2.msra.mxu0 0.0
    %2393 = vmatprep.subr.mxu0 0.0
    %2394 = vmatpush2.msra.mxu0 0.0
    %2395 = vmatprep.subr.mxu0 0.0
    %2396 = vmatpush2.msra.mxu0 0.0
    %2397 = vmatprep.subr.mxu0 0.0
    %2398 = vmatpush2.msra.mxu0 0.0
    %2399 = vmatprep.subr.mxu0 0.0
    %2400 = vmatpush2.msra.mxu0 0.0
    %2401 = vmatprep.subr.mxu0 0.0
    %2402 = vmatpush2.msra.mxu0 0.0
    %2403 = vmatprep.subr.mxu0 0.0
    %2404 = vmatpush2.msra.mxu0 0.0
    %2405 = vmatprep.mubr.f32.mxu0 0.0
    %2406 = vmatmul.mubr.f32.gmra.mxu0 %v2261
    %v2407 = vpop.f32.mrf.mxu0
    %v2408 = vadd.f32 0.0, %v2407
    %v2409 = vpop.f32.mrf.mxu0
    %2410 = vmatprep.mubr.f32.mxu0 0.0
    %2411 = vmatmul.mubr.f32.gmra.mxu0 %v2264
    %v2412 = vpop.f32.mrf.mxu0
    %v2413 = vadd.f32 0.0, %v2412
    %v2414 = vpop.f32.mrf.mxu0
    %2415 = vdwg.mxu0
    %v2417 = vlaneseq
    %v2418 = vshrl.u32 %v2417, 7
    %v2419 = vsub.s32 0, %v2418
    %v2420 = vrot.slane %v2246, %v2419
    %2422 = vmatprep.subr.mxu0 0.0
    %2423 = vmatpush1.msra.mxu0 0.0
    %2424 = vmatprep.subr.mxu0 0.0
    %2425 = vmatpush1.msra.mxu0 0.0
    %2426 = vmatprep.subr.mxu0 0.0
    %2427 = vmatpush1.msra.mxu0 0.0
    %2428 = vmatprep.subr.mxu0 0.0
    %2429 = vmatpush1.msra.mxu0 0.0
    %2430 = vmatprep.subr.mxu0 0.0
    %2431 = vmatpush1.msra.mxu0 0.0
    %2432 = vmatprep.subr.mxu0 0.0
    %2433 = vmatpush1.msra.mxu0 0.0
    %2434 = vmatprep.subr.mxu0 0.0
    %2435 = vmatpush1.msra.mxu0 0.0
    %2436 = vmatprep.subr.mxu0 0.0
    %2437 = vmatpush1.msra.mxu0 0.0
    %2438 = vmatprep.subr.mxu0 0.0
    %2439 = vmatpush1.msra.mxu0 0.0
    %2440 = vmatprep.subr.mxu0 0.0
    %2441 = vmatpush1.msra.mxu0 0.0
    %2442 = vmatprep.subr.mxu0 0.0
    %2443 = vmatpush1.msra.mxu0 0.0
    %2444 = vmatprep.subr.mxu0 0.0
    %2445 = vmatpush1.msra.mxu0 0.0
    %2446 = vmatprep.subr.mxu0 0.0
    %2447 = vmatpush1.msra.mxu0 0.0
    %2448 = vmatprep.subr.mxu0 0.0
    %2449 = vmatpush1.msra.mxu0 0.0
    %2450 = vmatprep.subr.mxu0 0.0
    %2451 = vmatpush1.msra.mxu0 %v2413
    %2452 = vmatprep.subr.mxu0 0.0
    %2453 = vmatpush1.msra.mxu0 %v2408
    %2454 = vmatprep.subr.mxu0 0.0
    %2455 = vmatpush2.msra.mxu0 0.0
    %2456 = vmatprep.subr.mxu0 0.0
    %2457 = vmatpush2.msra.mxu0 0.0
    %2458 = vmatprep.subr.mxu0 0.0
    %2459 = vmatpush2.msra.mxu0 0.0
    %2460 = vmatprep.subr.mxu0 0.0
    %2461 = vmatpush2.msra.mxu0 0.0
    %2462 = vmatprep.subr.mxu0 0.0
    %2463 = vmatpush2.msra.mxu0 0.0
    %2464 = vmatprep.subr.mxu0 0.0
    %2465 = vmatpush2.msra.mxu0 0.0
    %2466 = vmatprep.subr.mxu0 0.0
    %2467 = vmatpush2.msra.mxu0 0.0
    %2468 = vmatprep.subr.mxu0 0.0
    %2469 = vmatpush2.msra.mxu0 0.0
    %2470 = vmatprep.subr.mxu0 0.0
    %2471 = vmatpush2.msra.mxu0 0.0
    %2472 = vmatprep.subr.mxu0 0.0
    %2473 = vmatpush2.msra.mxu0 0.0
    %2474 = vmatprep.subr.mxu0 0.0
    %2475 = vmatpush2.msra.mxu0 0.0
    %2476 = vmatprep.subr.mxu0 0.0
    %2477 = vmatpush2.msra.mxu0 0.0
    %2478 = vmatprep.subr.mxu0 0.0
    %2479 = vmatpush2.msra.mxu0 0.0
    %2480 = vmatprep.subr.mxu0 0.0
    %2481 = vmatpush2.msra.mxu0 0.0
    %2482 = vmatprep.subr.mxu0 0.0
    %2483 = vmatpush2.msra.mxu0 0.0
    %2484 = vmatprep.subr.mxu0 0.0
    %2485 = vmatpush2.msra.mxu0 0.0
    %2486 = vmatprep.mubr.f32.mxu0 0.0
    %2487 = vmatmul.mubr.f32.gmra.mxu0 %v1794
    %v2488 = vpop.f32.mrf.mxu0
    %v2489 = vadd.f32 %v2420, %v2488
    %v2490 = vpop.f32.mrf.mxu0
    %2491 = vmatprep.mubr.f32.mxu0 0.0
    %2492 = vmatmul.mubr.f32.gmra.mxu0 %v1797
    %v2493 = vpop.f32.mrf.mxu0
    %v2494 = vadd.f32 %v2420, %v2493
    %v2495 = vpop.f32.mrf.mxu0
    %2496 = vdwg.mxu0
    %v2497 = vadd.f32 %v2489, %v2333
    %v2498 = vadd.f32 %v2494, %v2338
    %vm2499 = vcmp.ge.f32.partialorder %v2497, 0.0
    %vm2500 = vcmp.ge.f32.partialorder %v2498, 0.0
    %v2501 = vmul.f32 %v2497, 0.2
    %v2502 = vmul.f32 %v2498, 0.2
    %v2503 = vsel %vm2499, %v2497, %v2501
    %v2504 = vsel %vm2500, %v2498, %v2502
    %v2505 = vadd.f32 %v1697, %v2503
    %v2506 = vadd.f32 %v1698, %v2504
    %vm2507 = vcmask 64512
    %2508 = vst.msk [vmem:[%s14] sm:$0xff] %vm2507, %v2505
    %2509 = vst.msk [vmem:[%s14 + $0x8] sm:$0xff] %vm2507, %v2506
    // Predicated region
    $region70: #{tpu_custom_call.1} parent=1 // pred_check
      _
    $region71: #{tpu_custom_call.1} parent=1 // pred_check_branch
      %2511 = sbr.rel (0) target = $region73
    $region72: #{tpu_custom_call.1} parent=1 // pred_region
      _
    $region73: #{tpu_custom_call.1} parent=1 // pred_fallthru
      _
    // Predicated region
    $region74: #{tpu_custom_call.1} parent=1 // pred_check
      _
    $region75: #{tpu_custom_call.1} parent=1 // pred_check_branch
      %2513 = sbr.rel (0) target = $region77
    $region76: #{tpu_custom_call.1} parent=1 // pred_region
      _
    $region77: #{tpu_custom_call.1} parent=1 // pred_fallthru
      _
    %2514 = vsyncpa [#allocation3], 1
    %2515 = vsyncpa [#allocation5], 1

</llo_original>
